<compile_context>
chip_gen: v7x
topology: tpu7x:2x2x1
jax: 0.10.0
libtpu: 0.0.40
codegen_flags: <defaults>
</compile_context>

<pallas_src>
import functools

import numpy as np
import jax
import jax.numpy as jnp
from jax.experimental import pallas as pl
from jax.experimental.pallas import tpu as pltpu

_NEG = -1e30


def _rsr_conv_kernel(rel_tab_ref,              # SMEM (2, R): row0 = rel_w, row1 = exp(rel_w)
                     el_ref,                   # VMEM (1, Ts)  head proj of src tile (+bias)
                     er_ref,                   # VMEM (Td, 1)  tail proj of dst tile (+bias)
                     src_ref,                  # VMEM (Ts, Dp) src feature tile
                     adj_ref,                  # VMEM (R, Td, Ts) int8 edge mask, [dst, src]
                     out_ref,                  # VMEM (Td, Dp)
                     acc_ref, den_ref, m_ref,  # VMEM scratch: weighted sum / denom / running max
                     *, num_etypes, agg_dtype):
    k = pl.program_id(1)

    @pl.when(k == 0)
    def _init():
        acc_ref[...] = jnp.zeros_like(acc_ref)
        den_ref[...] = jnp.zeros_like(den_ref)
        m_ref[...] = jnp.full_like(m_ref, _NEG)

    # Base score: s_base[j, i] = er[j] + el[i]  (relation term folded in below).
    s_base = er_ref[...] + el_ref[...]                                       # [Td, Ts] f32

    # Fold the relation loop into per-edge quantities so a single exp / matmul
    # per tile covers all relations:
    #   rel_max[j,i] = max_{r: edge} rel[r]        (for the running max)
    #   w_rel[j,i]   = sum_{r: edge} exp(rel[r])
    rel_max = jnp.full(s_base.shape, _NEG, dtype=jnp.float32)
    w_rel = jnp.zeros(s_base.shape, dtype=jnp.float32)
    for r in range(num_etypes):
        rel_r = rel_tab_ref[0, r]
        erel_r = rel_tab_ref[1, r]
        edge_r = adj_ref[r].astype(jnp.float32) > 0.0
        rel_max = jnp.maximum(rel_max, jnp.where(edge_r, rel_r, _NEG))
        w_rel = w_rel + jnp.where(edge_r, erel_r, 0.0)

    # Online softmax update across src tiles.
    m_old = m_ref[...]                                                       # [Td, 1]
    m_tile = jnp.max(s_base + rel_max, axis=1, keepdims=True)                # max over edges in tile
    m_new = jnp.maximum(m_old, m_tile)
    scale = jnp.exp(m_old - m_new)                                           # [Td, 1], <= 1

    e_base = jnp.exp(s_base - m_new)
    # sum_r exp(score[r,j,i] - m_new) on edges, 0 elsewhere.  The where() also
    # discards any inf in e_base for dst rows that have not yet seen an edge.
    p = jnp.where(w_rel > 0.0, e_base * w_rel, 0.0)                          # [Td, Ts]

    if agg_dtype != jnp.float32:          # e.g. bf16 on v6e/v7x for 2x MXU throughput
        p_mm = p.astype(agg_dtype)
        src_mm = src_ref[...].astype(agg_dtype)
    else:
        p_mm, src_mm = p, src_ref[...]

    den_ref[...] = den_ref[...] * scale + jnp.sum(p, axis=1, keepdims=True)
    acc_ref[...] = acc_ref[...] * scale + jnp.dot(
        p_mm, src_mm, preferred_element_type=jnp.float32)
    m_ref[...] = m_new

    @pl.when(k == pl.num_programs(1) - 1)
    def _finalize():
        inv = 1.0 / jnp.maximum(den_ref[...], 1e-30)                          # zero in-degree -> 0
        out_ref[...] = (acc_ref[...] * inv).astype(out_ref.dtype)


def rsr_conv(nfeat, head_w, head_b, tail_w, tail_b, rel_w, adj,
             *, block_n=128, agg_dtype=jnp.float32):
    """RSRConv forward.  adj is a dense [R, N_src, N_dst] edge mask."""
    n, d = nfeat.shape
    num_etypes = adj.shape[0]
    f32 = jnp.float32

    d_pad = max(128, ((d + 127) // 128) * 128)            # lane-dense feature width
    n_pad = ((n + block_n - 1) // block_n) * block_n

    nfeat_f = nfeat.astype(f32)
    nfeat_p = jnp.zeros((n_pad, d_pad), f32).at[:n, :d].set(nfeat_f)

    # el / er are per-node scalars -> project once here instead of re-doing it
    # inside every grid step.
    el = (nfeat_f @ head_w.astype(f32).reshape(d, 1)).reshape(-1) \
        + head_b.astype(f32).reshape(-1)[0]
    er = (nfeat_f @ tail_w.astype(f32).reshape(d, 1)).reshape(-1) \
        + tail_b.astype(f32).reshape(-1)[0]
    el_row = jnp.zeros((1, n_pad), f32).at[0, :n].set(el)   # src-side scores (row)
    er_col = jnp.zeros((n_pad, 1), f32).at[:n, 0].set(er)   # dst-side scores (column)

    # [R, src, dst] -> [R, dst, src] once (outside the kernel), stored as int8.
    adj_t = (jnp.swapaxes(adj, 1, 2) != 0).astype(jnp.int8)
    adj_p = jnp.zeros((num_etypes, n_pad, n_pad), jnp.int8).at[:, :n, :n].set(adj_t)

    rel_flat = rel_w.astype(f32).reshape(-1)
    rel_tab = jnp.stack([rel_flat, jnp.exp(rel_flat)], axis=0)               # (2, R) -> SMEM

    kernel = functools.partial(_rsr_conv_kernel, num_etypes=num_etypes,
                               agg_dtype=agg_dtype)

    out_p = pl.pallas_call(
        kernel,
        out_shape=jax.ShapeDtypeStruct((n_pad, d_pad), f32),
        grid_spec=pltpu.PrefetchScalarGridSpec(
            num_scalar_prefetch=1,
            grid=(n_pad // block_n, n_pad // block_n),
            in_specs=[
                pl.BlockSpec((1, block_n), lambda i, k, rt: (0, k)),          # el row (src)
                pl.BlockSpec((block_n, 1), lambda i, k, rt: (i, 0)),          # er col (dst)
                pl.BlockSpec((block_n, d_pad), lambda i, k, rt: (k, 0)),      # src feature tile
                pl.BlockSpec((num_etypes, block_n, block_n),
                             lambda i, k, rt: (0, i, k)),                     # adj tile (int8)
            ],
            out_specs=pl.BlockSpec((block_n, d_pad), lambda i, k, rt: (i, 0)),
            scratch_shapes=[
                pltpu.VMEM((block_n, d_pad), jnp.float32),   # acc: weighted feature sum
                pltpu.VMEM((block_n, 1), jnp.float32),       # denom
                pltpu.VMEM((block_n, 1), jnp.float32),       # running max
            ],
        ),
        compiler_params=pltpu.CompilerParams(
            dimension_semantics=("parallel", "arbitrary")),
    )(rel_tab, el_row, er_col, nfeat_p, adj_p)

    return out_p[:n, :d].astype(nfeat.dtype)


def rsr_conv_ref(nfeat, head_w, head_b, tail_w, tail_b, rel_w, adj):
    """Pure-JAX reference of the same semantics (for correctness check)."""
    el = nfeat @ head_w + head_b                                # [N, 1]
    er = nfeat @ tail_w + tail_b                                # [N, 1]
    scores = (el[None, :, :]                                    # el[i]
              + jnp.swapaxes(er[None, :, :], 1, 2)              # er[j]
              + rel_w[:, None, None])                           # rel[r]
    scores = jnp.where(adj > 0, scores, -1e30)
    m = jnp.max(scores, axis=(0, 1), keepdims=True)             # per-dst max
    e = jnp.where(adj > 0, jnp.exp(scores - m), 0.0)
    denom = jnp.sum(e, axis=(0, 1))                             # [N]
    alpha = e / jnp.maximum(denom, 1e-30)[None, None, :]
    return jnp.einsum('rij,id->jd', alpha, nfeat)


if __name__ == "__main__":
    N, D, R = 200, 32, 3     # nodes, in_feats, num_etypes (N deliberately not a multiple of 128)

    key = jax.random.PRNGKey(0)
    k1, k2, k3, k4, k5, k6, k7 = jax.random.split(key, 7)

    gain = np.sqrt(2.0)                                         # calculate_gain('relu')
    std_lin = gain * np.sqrt(2.0 / (D + 1))                     # xavier_normal for [1, D]
    head_w = (jax.random.normal(k1, (D, 1)) * std_lin).astype(jnp.float32)
    tail_w = (jax.random.normal(k2, (D, 1)) * std_lin).astype(jnp.float32)
    bound = 1.0 / np.sqrt(D)                                    # default nn.Linear bias init
    head_b = jax.random.uniform(k3, (1,), minval=-bound, maxval=bound).astype(jnp.float32)
    tail_b = jax.random.uniform(k4, (1,), minval=-bound, maxval=bound).astype(jnp.float32)
    std_rel = gain * np.sqrt(2.0 / (R + 1))                     # xavier_normal for [R, 1]
    rel_w = (jax.random.normal(k5, (R,)) * std_rel).astype(jnp.float32)

    nfeat = jax.random.normal(k6, (N, D), dtype=jnp.float32)
    adj = (jax.random.uniform(k7, (R, N, N)) < 0.3).astype(jnp.float32)
    adj = adj.at[:, :, :3].set(0.0)                             # a few zero-in-degree dst nodes

    out = rsr_conv(nfeat, head_w, head_b, tail_w, tail_b, rel_w, adj)
    out = jax.block_until_ready(out)

    ref = rsr_conv_ref(nfeat, head_w, head_b, tail_w, tail_b, rel_w, adj)
    err = float(np.max(np.abs(np.asarray(out) - np.asarray(ref))))
    assert np.allclose(np.asarray(out), np.asarray(ref), rtol=1e-4, atol=1e-4), err

    print("KERNEL_OK")
</pallas_src>

<mosaic_0001>
module attributes {stable_mosaic.version = 11 : i64} {
  func.func @_rsr_conv_kernel(%arg0: i32, %arg1: i32, %arg2: memref<2x3xf32, #tpu.memory_space<smem>>, %arg3: memref<1x128xf32, #tpu.memory_space<vmem>>, %arg4: memref<128x1xf32, #tpu.memory_space<vmem>>, %arg5: memref<128x128xf32, #tpu.memory_space<vmem>>, %arg6: memref<3x128x128xi8, #tpu.memory_space<vmem>>, %arg7: memref<128x128xf32, #tpu.memory_space<vmem>>, %arg8: memref<128x128xf32, #tpu.memory_space<vmem>>, %arg9: memref<128x1xf32, #tpu.memory_space<vmem>>, %arg10: memref<128x1xf32, #tpu.memory_space<vmem>>) attributes {dimension_semantics = [#tpu.dimension_semantics<parallel>, #tpu.dimension_semantics<arbitrary>], iteration_bounds = array<i64: 2, 2>, scalar_prefetch = 1 : i64, scratch_operands = 3 : i64, tpu.core_type = #tpu.core_type<tc>, window_params = [{transform_indices = @transform_0, window_bounds = array<i64: 1, 128>}, {transform_indices = @transform_1, window_bounds = array<i64: 128, 1>}, {transform_indices = @transform_2, window_bounds = array<i64: 128, 128>}, {transform_indices = @transform_3, window_bounds = array<i64: 3, 128, 128>}, {transform_indices = @transform_4, window_bounds = array<i64: 128, 128>}]} {
    %c0_i32 = arith.constant 0 : i32
    %0 = arith.cmpi eq, %arg1, %c0_i32 : i32
    %1 = arith.extui %0 : i1 to i32
    %c0_i32_0 = arith.constant 0 : i32
    %2 = arith.cmpi ne, %1, %c0_i32_0 : i32
    scf.if %2 {
      %cst_53 = arith.constant 0.000000e+00 : f32
      %87 = vector.broadcast %cst_53 : f32 to vector<128x128xf32>
      %c0_54 = arith.constant 0 : index
      %c0_55 = arith.constant 0 : index
      %88 = vector.load %arg8[%c0_54, %c0_55] : memref<128x128xf32, #tpu.memory_space<vmem>>, vector<128x128xf32>
      tpu.vector_store %arg8[%c0_54, %c0_55], %87 {strides = array<i32>} : memref<128x128xf32, #tpu.memory_space<vmem>>, vector<128x128xf32>,
      %cst_56 = arith.constant 0.000000e+00 : f32
      %89 = vector.broadcast %cst_56 : f32 to vector<128x1xf32>
      %c0_57 = arith.constant 0 : index
      %c0_58 = arith.constant 0 : index
      %90 = vector.load %arg9[%c0_57, %c0_58] : memref<128x1xf32, #tpu.memory_space<vmem>>, vector<128x1xf32>
      tpu.vector_store %arg9[%c0_57, %c0_58], %89 {strides = array<i32>} : memref<128x1xf32, #tpu.memory_space<vmem>>, vector<128x1xf32>,
      %cst_59 = arith.constant -1.000000e+30 : f32
      %91 = vector.broadcast %cst_59 : f32 to vector<128x1xf32>
      %c0_60 = arith.constant 0 : index
      %c0_61 = arith.constant 0 : index
      %92 = vector.load %arg10[%c0_60, %c0_61] : memref<128x1xf32, #tpu.memory_space<vmem>>, vector<128x1xf32>
      tpu.vector_store %arg10[%c0_60, %c0_61], %91 {strides = array<i32>} : memref<128x1xf32, #tpu.memory_space<vmem>>, vector<128x1xf32>,
    } else {
    }
    %c0 = arith.constant 0 : index
    %c0_1 = arith.constant 0 : index
    %3 = vector.load %arg4[%c0, %c0_1] : memref<128x1xf32, #tpu.memory_space<vmem>>, vector<128x1xf32>
    %c0_2 = arith.constant 0 : index
    %c0_3 = arith.constant 0 : index
    %4 = vector.load %arg3[%c0_2, %c0_3] : memref<1x128xf32, #tpu.memory_space<vmem>>, vector<1x128xf32>
    %5 = vector.broadcast %3 : vector<128x1xf32> to vector<128x128xf32>
    %6 = vector.broadcast %4 : vector<1x128xf32> to vector<128x128xf32>
    %7 = arith.addf %5, %6 : vector<128x128xf32>
    %cst = arith.constant -1.000000e+30 : f32
    %8 = vector.broadcast %cst : f32 to vector<128x128xf32>
    %cst_4 = arith.constant 0.000000e+00 : f32
    %9 = vector.broadcast %cst_4 : f32 to vector<128x128xf32>
    %c0_5 = arith.constant 0 : index
    %c0_6 = arith.constant 0 : index
    %10 = memref.load %arg2[%c0_5, %c0_6] : memref<2x3xf32, #tpu.memory_space<smem>>
    %c1 = arith.constant 1 : index
    %c0_7 = arith.constant 0 : index
    %11 = memref.load %arg2[%c1, %c0_7] : memref<2x3xf32, #tpu.memory_space<smem>>
    %c0_8 = arith.constant 0 : index
    %c0_9 = arith.constant 0 : index
    %c0_10 = arith.constant 0 : index
    %12 = vector.load %arg6[%c0_8, %c0_9, %c0_10] : memref<3x128x128xi8, #tpu.memory_space<vmem>>, vector<1x128x128xi8>
    %13 = vector.shape_cast %12 : vector<1x128x128xi8> to vector<128x128xi8>
    %14 = arith.sitofp %13 : vector<128x128xi8> to vector<128x128xf32>
    %cst_11 = arith.constant 0.000000e+00 : f32
    %15 = vector.broadcast %cst_11 : f32 to vector<128x128xf32>
    %16 = arith.cmpf ogt, %14, %15 : vector<128x128xf32>
    %cst_12 = arith.constant -1.000000e+30 : f32
    %17 = vector.broadcast %10 : f32 to vector<128x128xf32>
    %18 = vector.broadcast %cst_12 : f32 to vector<128x128xf32>
    %19 = arith.select %16, %17, %18 : vector<128x128xi1>, vector<128x128xf32>
    %20 = arith.maximumf %8, %19 : vector<128x128xf32>
    %cst_13 = arith.constant 0.000000e+00 : f32
    %21 = vector.broadcast %11 : f32 to vector<128x128xf32>
    %22 = vector.broadcast %cst_13 : f32 to vector<128x128xf32>
    %23 = arith.select %16, %21, %22 : vector<128x128xi1>, vector<128x128xf32>
    %24 = arith.addf %9, %23 : vector<128x128xf32>
    %c0_14 = arith.constant 0 : index
    %c1_15 = arith.constant 1 : index
    %25 = memref.load %arg2[%c0_14, %c1_15] : memref<2x3xf32, #tpu.memory_space<smem>>
    %c1_16 = arith.constant 1 : index
    %c1_17 = arith.constant 1 : index
    %26 = memref.load %arg2[%c1_16, %c1_17] : memref<2x3xf32, #tpu.memory_space<smem>>
    %c1_18 = arith.constant 1 : index
    %c0_19 = arith.constant 0 : index
    %c0_20 = arith.constant 0 : index
    %27 = vector.load %arg6[%c1_18, %c0_19, %c0_20] : memref<3x128x128xi8, #tpu.memory_space<vmem>>, vector<1x128x128xi8>
    %28 = vector.shape_cast %27 : vector<1x128x128xi8> to vector<128x128xi8>
    %29 = arith.sitofp %28 : vector<128x128xi8> to vector<128x128xf32>
    %cst_21 = arith.constant 0.000000e+00 : f32
    %30 = vector.broadcast %cst_21 : f32 to vector<128x128xf32>
    %31 = arith.cmpf ogt, %29, %30 : vector<128x128xf32>
    %cst_22 = arith.constant -1.000000e+30 : f32
    %32 = vector.broadcast %25 : f32 to vector<128x128xf32>
    %33 = vector.broadcast %cst_22 : f32 to vector<128x128xf32>
    %34 = arith.select %31, %32, %33 : vector<128x128xi1>, vector<128x128xf32>
    %35 = arith.maximumf %20, %34 : vector<128x128xf32>
    %cst_23 = arith.constant 0.000000e+00 : f32
    %36 = vector.broadcast %26 : f32 to vector<128x128xf32>
    %37 = vector.broadcast %cst_23 : f32 to vector<128x128xf32>
    %38 = arith.select %31, %36, %37 : vector<128x128xi1>, vector<128x128xf32>
    %39 = arith.addf %24, %38 : vector<128x128xf32>
    %c0_24 = arith.constant 0 : index
    %c2 = arith.constant 2 : index
    %40 = memref.load %arg2[%c0_24, %c2] : memref<2x3xf32, #tpu.memory_space<smem>>
    %c1_25 = arith.constant 1 : index
    %c2_26 = arith.constant 2 : index
    %41 = memref.load %arg2[%c1_25, %c2_26] : memref<2x3xf32, #tpu.memory_space<smem>>
    %c2_27 = arith.constant 2 : index
    %c0_28 = arith.constant 0 : index
    %c0_29 = arith.constant 0 : index
    %42 = vector.load %arg6[%c2_27, %c0_28, %c0_29] : memref<3x128x128xi8, #tpu.memory_space<vmem>>, vector<1x128x128xi8>
    %43 = vector.shape_cast %42 : vector<1x128x128xi8> to vector<128x128xi8>
    %44 = arith.sitofp %43 : vector<128x128xi8> to vector<128x128xf32>
    %cst_30 = arith.constant 0.000000e+00 : f32
    %45 = vector.broadcast %cst_30 : f32 to vector<128x128xf32>
    %46 = arith.cmpf ogt, %44, %45 : vector<128x128xf32>
    %cst_31 = arith.constant -1.000000e+30 : f32
    %47 = vector.broadcast %40 : f32 to vector<128x128xf32>
    %48 = vector.broadcast %cst_31 : f32 to vector<128x128xf32>
    %49 = arith.select %46, %47, %48 : vector<128x128xi1>, vector<128x128xf32>
    %50 = arith.maximumf %35, %49 : vector<128x128xf32>
    %cst_32 = arith.constant 0.000000e+00 : f32
    %51 = vector.broadcast %41 : f32 to vector<128x128xf32>
    %52 = vector.broadcast %cst_32 : f32 to vector<128x128xf32>
    %53 = arith.select %46, %51, %52 : vector<128x128xi1>, vector<128x128xf32>
    %54 = arith.addf %39, %53 : vector<128x128xf32>
    %c0_33 = arith.constant 0 : index
    %c0_34 = arith.constant 0 : index
    %55 = vector.load %arg10[%c0_33, %c0_34] : memref<128x1xf32, #tpu.memory_space<vmem>>, vector<128x1xf32>
    %56 = arith.addf %7, %50 : vector<128x128xf32>
    %cst_35 = arith.constant dense<0xFF800000> : vector<128xf32>
    %57 = vector.multi_reduction <maximumf>, %56, %cst_35 [1] : vector<128x128xf32> to vector<128xf32>
    %58 = vector.shape_cast %57 : vector<128xf32> to vector<128x1xf32>
    %59 = arith.maximumf %55, %58 : vector<128x1xf32>
    %60 = arith.subf %55, %59 : vector<128x1xf32>
    %61 = math.exp %60 : vector<128x1xf32>
    %62 = vector.broadcast %59 : vector<128x1xf32> to vector<128x128xf32>
    %63 = arith.subf %7, %62 : vector<128x128xf32>
    %64 = math.exp %63 : vector<128x128xf32>
    %cst_36 = arith.constant 0.000000e+00 : f32
    %65 = vector.broadcast %cst_36 : f32 to vector<128x128xf32>
    %66 = arith.cmpf ogt, %54, %65 : vector<128x128xf32>
    %67 = arith.mulf %64, %54 : vector<128x128xf32>
    %cst_37 = arith.constant 0.000000e+00 : f32
    %68 = vector.broadcast %cst_37 : f32 to vector<128x128xf32>
    %69 = arith.select %66, %67, %68 : vector<128x128xi1>, vector<128x128xf32>
    %c0_38 = arith.constant 0 : index
    %c0_39 = arith.constant 0 : index
    %70 = vector.load %arg5[%c0_38, %c0_39] : memref<128x128xf32, #tpu.memory_space<vmem>>, vector<128x128xf32>
    %c0_40 = arith.constant 0 : index
    %c0_41 = arith.constant 0 : index
    %71 = vector.load %arg9[%c0_40, %c0_41] : memref<128x1xf32, #tpu.memory_space<vmem>>, vector<128x1xf32>
    %72 = arith.mulf %71, %61 : vector<128x1xf32>
    %cst_42 = arith.constant dense<0.000000e+00> : vector<128xf32>
    %73 = vector.multi_reduction <add>, %69, %cst_42 [1] : vector<128x128xf32> to vector<128xf32>
    %74 = vector.shape_cast %73 : vector<128xf32> to vector<128x1xf32>
    %75 = arith.addf %72, %74 : vector<128x1xf32>
    %c0_43 = arith.constant 0 : index
    %c0_44 = arith.constant 0 : index
    %76 = vector.load %arg9[%c0_43, %c0_44] : memref<128x1xf32, #tpu.memory_space<vmem>>, vector<128x1xf32>
    tpu.vector_store %arg9[%c0_43, %c0_44], %75 {strides = array<i32>} : memref<128x1xf32, #tpu.memory_space<vmem>>, vector<128x1xf32>,
    %c0_45 = arith.constant 0 : index
    %c0_46 = arith.constant 0 : index
    %77 = vector.load %arg8[%c0_45, %c0_46] : memref<128x128xf32, #tpu.memory_space<vmem>>, vector<128x128xf32>
    %78 = vector.broadcast %61 : vector<128x1xf32> to vector<128x128xf32>
    %79 = arith.mulf %77, %78 : vector<128x128xf32>
    %cst_47 = arith.constant dense<0.000000e+00> : vector<128x128xf32>
    %80 = tpu.matmul %69, %70, %cst_47 {dimension_numbers = #tpu.dot_dimension_numbers<[1], [0], [0], [1], [0, 0, 1, 1], [], []>} : vector<128x128xf32>, vector<128x128xf32>, vector<128x128xf32> -> vector<128x128xf32>
    %81 = arith.addf %79, %80 : vector<128x128xf32>
    %c0_48 = arith.constant 0 : index
    %c0_49 = arith.constant 0 : index
    %82 = vector.load %arg8[%c0_48, %c0_49] : memref<128x128xf32, #tpu.memory_space<vmem>>, vector<128x128xf32>
    tpu.vector_store %arg8[%c0_48, %c0_49], %81 {strides = array<i32>} : memref<128x128xf32, #tpu.memory_space<vmem>>, vector<128x128xf32>,
    %c0_50 = arith.constant 0 : index
    %c0_51 = arith.constant 0 : index
    %83 = vector.load %arg10[%c0_50, %c0_51] : memref<128x1xf32, #tpu.memory_space<vmem>>, vector<128x1xf32>
    tpu.vector_store %arg10[%c0_50, %c0_51], %59 {strides = array<i32>} : memref<128x1xf32, #tpu.memory_space<vmem>>, vector<128x1xf32>,
    %c1_i32 = arith.constant 1 : i32
    %84 = arith.cmpi eq, %arg1, %c1_i32 : i32
    %85 = arith.extui %84 : i1 to i32
    %c0_i32_52 = arith.constant 0 : i32
    %86 = arith.cmpi ne, %85, %c0_i32_52 : i32
    scf.if %86 {
      %c0_53 = arith.constant 0 : index
      %c0_54 = arith.constant 0 : index
      %87 = vector.load %arg9[%c0_53, %c0_54] : memref<128x1xf32, #tpu.memory_space<vmem>>, vector<128x1xf32>
      %cst_55 = arith.constant 1.000000e-30 : f32
      %88 = vector.broadcast %cst_55 : f32 to vector<128x1xf32>
      %89 = arith.maximumf %87, %88 : vector<128x1xf32>
      %cst_56 = arith.constant 1.000000e+00 : f32
      %90 = vector.broadcast %cst_56 : f32 to vector<128x1xf32>
      %91 = arith.divf %90, %89 : vector<128x1xf32>
      %c0_57 = arith.constant 0 : index
      %c0_58 = arith.constant 0 : index
      %92 = vector.load %arg8[%c0_57, %c0_58] : memref<128x128xf32, #tpu.memory_space<vmem>>, vector<128x128xf32>
      %93 = vector.broadcast %91 : vector<128x1xf32> to vector<128x128xf32>
      %94 = arith.mulf %92, %93 : vector<128x128xf32>
      %c0_59 = arith.constant 0 : index
      %c0_60 = arith.constant 0 : index
      %95 = vector.load %arg7[%c0_59, %c0_60] : memref<128x128xf32, #tpu.memory_space<vmem>>, vector<128x128xf32>
      tpu.vector_store %arg7[%c0_59, %c0_60], %94 {strides = array<i32>} : memref<128x128xf32, #tpu.memory_space<vmem>>, vector<128x128xf32>,
    } else {
    }
    return
  }
  func.func @transform_0(%arg0: i32, %arg1: i32, %arg2: memref<2x3xf32, #tpu.memory_space<smem>>) -> (i32, i32) {
    %c0_i32 = arith.constant 0 : i32
    %c0_i32_0 = arith.constant 0 : i32
    return %c0_i32, %arg1 : i32, i32
  }
  func.func @transform_1(%arg0: i32, %arg1: i32, %arg2: memref<2x3xf32, #tpu.memory_space<smem>>) -> (i32, i32) {
    %c0_i32 = arith.constant 0 : i32
    %c0_i32_0 = arith.constant 0 : i32
    return %arg0, %c0_i32 : i32, i32
  }
  func.func @transform_2(%arg0: i32, %arg1: i32, %arg2: memref<2x3xf32, #tpu.memory_space<smem>>) -> (i32, i32) {
    %c0_i32 = arith.constant 0 : i32
    %c0_i32_0 = arith.constant 0 : i32
    return %arg1, %c0_i32 : i32, i32
  }
  func.func @transform_3(%arg0: i32, %arg1: i32, %arg2: memref<2x3xf32, #tpu.memory_space<smem>>) -> (i32, i32, i32) {
    %c0_i32 = arith.constant 0 : i32
    %c0_i32_0 = arith.constant 0 : i32
    return %c0_i32, %arg0, %arg1 : i32, i32, i32
  }
  func.func @transform_4(%arg0: i32, %arg1: i32, %arg2: memref<2x3xf32, #tpu.memory_space<smem>>) -> (i32, i32) {
    %c0_i32 = arith.constant 0 : i32
    %c0_i32_0 = arith.constant 0 : i32
    return %arg0, %c0_i32 : i32, i32
  }
}

</mosaic_0001>

<llo_original>
// kernel: tpu_custom_call.1
$region0: #{tpu_custom_call.1}
  #allocation0 [shape = 'u32[]', space=smem, size = 0x4, offset = 0x4, fixed_abs, tag = 'smem constant byte address 0x4 - core index']
  #allocation1 [shape = 'u32[144,128]{1,0:T(1,128)}', space=vmem, size = 0x12000, scoped, tag = 'internal scratch']
  #allocation2 [shape = 'f32[128,128]{1,0:T(8,128)}', space=vmem, size = 0x10000, scoped, tag = 'scratch operand']
  #allocation3 [shape = 'f32[128,1]{1,0:T(8,128)}', space=vmem, size = 0x10000, scoped, tag = 'scratch operand']
  #allocation4 [shape = 'f32[128,1]{1,0:T(8,128)}', space=vmem, size = 0x10000, scoped, tag = 'scratch operand']
  #allocation5 [shape = 's32[1]{0}', space=sflag, size = 0x4, scoped, tag = 'scoped memory for tpu_custom_call.1']
  #allocation6 [shape = 'u8[1024]{0}', space=smem, size = 0x400, scoped, tag = 'prefetched SMEM operand 0']
  #allocation11 [shape = 's32[]', space=sflag, size = 0x4, offset = 0, fixed_abs, tag = 'sflag constant byte address 0x0 - dummy sync flag']
  %s0 = inlined_call_operand.vmem [shape: f32[2,3], index: 0, kind: input, shape index: {}]
  %s1 = inlined_call_operand.vmem [shape: f32[1,256], index: 1, kind: input, shape index: {}]
  %s2 = inlined_call_operand.vmem [shape: f32[256,1], index: 2, kind: input, shape index: {}]
  %s3 = inlined_call_operand.vmem [shape: f32[256,128], index: 3, kind: input, shape index: {}]
  %s4 = inlined_call_operand.hbm [shape: s8[3,256,256], index: 4, kind: input, shape index: {}]
  %s5 = inlined_call_operand.hbm [shape: f32[256,128], index: 5, kind: output, shape index: {}]
  %s6 = sld [smem:[#allocation0]]
  $region61: #{tpu_custom_call.1} parent=0
    _
  %s8 = ssub.s32 1, %s6
  %s9 = scalar_select 0, %s8, %s6
  %s10 = sshll.u32 %s0, 4
  %s11 = int_to_ptr.vmem [resolvable:$true] %s10
  %13 = dma.vmem_to_smem %s11, 32, [#allocation6], [#allocation5]
  %14 = dma.done [#allocation5], 32
  %15 = sfence
  $region1: #{tpu_custom_call.1} parent=0
    #allocation7 [shape = 'u8[98304]{0}', space=vmem, size = 0x18000, scoped, tag = 'input window, operand 4']
    #allocation8 [shape = 's32[2]{0}', space=sflag, size = 0x8, scoped, tag = 'scoped memory for tpu_custom_call.1']
    #allocation9 [shape = 's32[2]{0}', space=sflag, size = 0x8, scoped, tag = 'scoped memory for tpu_custom_call.1']
    #allocation10 [shape = 'u8[131072]{0}', space=vmem, size = 0x20000, scoped, tag = 'output window, operand 0']
    %16 = vsyncpa [#allocation8], 0
    %s17 = scalar_lea.sflag [#allocation8], 1
    %18 = vsyncpa %s17, 0
    %19 = vsyncpa [#allocation9], 0
    %s20 = scalar_lea.sflag [#allocation9], 1
    %21 = vsyncpa %s20, 0
    loop: start=0, step=1, limit=6
    $region2: #{tpu_custom_call.1} parent=1 // loop_pre_header
      _
    $region3: #{tpu_custom_call.1} parent=1 // loop_header
      %s23 = sphi 0, %s27
      %p24 = scmp.ge.s32.totalorder %s23, 6
      %s30 = sphi 0, %s42
      %s31 = sphi 0, %s38
      %s32 = sphi 0, %s30
      %s33 = sphi 0, %s31
      %s34 = sphi 0, %s32
      %s35 = sphi 0, %s33
      %s45 = sphi 0, %s47
      %s48 = sphi 0, %s45
      %s49 = sphi 0, %s48
      %s65 = sphi 0, %s49
      %s71 = sphi 0, %s73
      %s74 = sphi 0, %s71
      %s75 = sphi 0, %s74
      %s91 = sphi 0, %s75
      %s97 = sphi 0, %s99
      %s100 = sphi 0, %s97
      %s101 = sphi 0, %s100
      %s117 = sphi 0, %s101
      %s125 = sphi 0, %s127
      %s128 = sphi 0, %s125
      %s129 = sphi 0, %s128
      %s145 = sphi 0, %s129
      %s151 = sphi 0, %s153
      %s154 = sphi 0, %s151
      %s155 = sphi 0, %s154
      %s171 = sphi 0, %s155
    $region4: #{tpu_custom_call.1} parent=1 // loop_header_branch
      %26 = sbr.rel (%p24) target = $region8
    $region5: #{tpu_custom_call.1} parent=1 // loop_body
      %s28 = ssub.s32 %s23, 1
      %s29 = ssub.s32 %s23, 2
      %s36 = sadd.s32 1, %s31
      %p37 = scmp.ge.s32.totalorder %s36, 2
      %s38 = scalar_select %p37, 0, %s36
      %s39 = sadd.s32 1, %s30
      %s40 = scalar_select %p37, %s39, %s30
      %p41 = scmp.ge.s32.totalorder %s40, 2
      %s42 = scalar_select %p41, 0, %s40
      %s43 = ssub.s32 %s31, %s38
      %p44 = scmp.eq.s32.totalorder %s43, 0
      %s46 = sadd.s32 %s45, 1
      %s47 = scalar_select %p44, %s45, %s46
      %p50 = pneg %p44
      %p51 = scmp.eq.s32.totalorder %s23, 3
      %p52 = por %p50, %p51
      %p53 = scmp.ne.s32.totalorder %s45, %s48
      %p54 = scmp.eq.s32.totalorder %s23, 0
      %p55 = por %p53, %p54
      %p56 = scmp.ne.s32.totalorder %s45, %s48
      %p57 = scmp.eq.s32.totalorder %s28, 3
      %p58 = por %p56, %p57
      %p59 = scmp.ne.s32.totalorder %s48, %s49
      %p60 = scmp.eq.s32.totalorder %s28, 0
      %p61 = por %p59, %p60
      %p62 = scmp.ne.s32.totalorder %s48, %s49
      %p63 = scmp.eq.s32.totalorder %s29, 3
      %p64 = por %p62, %p63
      %p66 = scmp.ne.s32.totalorder %s49, %s65
      %p67 = scmp.eq.s32.totalorder %s29, 0
      %p68 = por %p66, %p67
      %s69 = ssub.s32 %s30, %s42
      %p70 = scmp.eq.s32.totalorder %s69, 0
      %s72 = sadd.s32 %s71, 1
      %s73 = scalar_select %p70, %s71, %s72
      %p76 = pneg %p70
      %p77 = scmp.eq.s32.totalorder %s23, 3
      %p78 = por %p76, %p77
      %p79 = scmp.ne.s32.totalorder %s71, %s74
      %p80 = scmp.eq.s32.totalorder %s23, 0
      %p81 = por %p79, %p80
      %p82 = scmp.ne.s32.totalorder %s71, %s74
      %p83 = scmp.eq.s32.totalorder %s28, 3
      %p84 = por %p82, %p83
      %p85 = scmp.ne.s32.totalorder %s74, %s75
      %p86 = scmp.eq.s32.totalorder %s28, 0
      %p87 = por %p85, %p86
      %p88 = scmp.ne.s32.totalorder %s74, %s75
      %p89 = scmp.eq.s32.totalorder %s29, 3
      %p90 = por %p88, %p89
      %p92 = scmp.ne.s32.totalorder %s75, %s91
      %p93 = scmp.eq.s32.totalorder %s29, 0
      %p94 = por %p92, %p93
      %s95 = ssub.s32 %s31, %s38
      %p96 = scmp.eq.s32.totalorder %s95, 0
      %s98 = sadd.s32 %s97, 1
      %s99 = scalar_select %p96, %s97, %s98
      %p102 = pneg %p96
      %p103 = scmp.eq.s32.totalorder %s23, 3
      %p104 = por %p102, %p103
      %p105 = scmp.ne.s32.totalorder %s97, %s100
      %p106 = scmp.eq.s32.totalorder %s23, 0
      %p107 = por %p105, %p106
      %p108 = scmp.ne.s32.totalorder %s97, %s100
      %p109 = scmp.eq.s32.totalorder %s28, 3
      %p110 = por %p108, %p109
      %p111 = scmp.ne.s32.totalorder %s100, %s101
      %p112 = scmp.eq.s32.totalorder %s28, 0
      %p113 = por %p111, %p112
      %p114 = scmp.ne.s32.totalorder %s100, %s101
      %p115 = scmp.eq.s32.totalorder %s29, 3
      %p116 = por %p114, %p115
      %p118 = scmp.ne.s32.totalorder %s101, %s117
      %p119 = scmp.eq.s32.totalorder %s29, 0
      %p120 = por %p118, %p119
      %s121 = ssub.s32 %s30, %s42
      %s122 = ssub.s32 %s31, %s38
      %s123 = sor.u32 %s121, %s122
      %p124 = scmp.eq.s32.totalorder %s123, 0
      %s126 = sadd.s32 %s125, 1
      %s127 = scalar_select %p124, %s125, %s126
      %p130 = pneg %p124
      %p131 = scmp.eq.s32.totalorder %s23, 3
      %p132 = por %p130, %p131
      %p133 = scmp.ne.s32.totalorder %s125, %s128
      %p134 = scmp.eq.s32.totalorder %s23, 0
      %p135 = por %p133, %p134
      %p136 = scmp.ne.s32.totalorder %s125, %s128
      %p137 = scmp.eq.s32.totalorder %s28, 3
      %p138 = por %p136, %p137
      %p139 = scmp.ne.s32.totalorder %s128, %s129
      %p140 = scmp.eq.s32.totalorder %s28, 0
      %p141 = por %p139, %p140
      %p142 = scmp.ne.s32.totalorder %s128, %s129
      %p143 = scmp.eq.s32.totalorder %s29, 3
      %p144 = por %p142, %p143
      %p146 = scmp.ne.s32.totalorder %s129, %s145
      %p147 = scmp.eq.s32.totalorder %s29, 0
      %p148 = por %p146, %p147
      %s149 = ssub.s32 %s30, %s42
      %p150 = scmp.eq.s32.totalorder %s149, 0
      %s152 = sadd.s32 %s151, 1
      %s153 = scalar_select %p150, %s151, %s152
      %p156 = pneg %p150
      %p157 = scmp.eq.s32.totalorder %s23, 3
      %p158 = por %p156, %p157
      %p159 = scmp.ne.s32.totalorder %s151, %s154
      %p160 = scmp.eq.s32.totalorder %s23, 0
      %p161 = por %p159, %p160
      %p162 = scmp.ne.s32.totalorder %s151, %s154
      %p163 = scmp.eq.s32.totalorder %s28, 3
      %p164 = por %p162, %p163
      %p165 = scmp.ne.s32.totalorder %s154, %s155
      %p166 = scmp.eq.s32.totalorder %s28, 0
      %p167 = por %p165, %p166
      %p168 = scmp.ne.s32.totalorder %s154, %s155
      %p169 = scmp.eq.s32.totalorder %s29, 3
      %p170 = por %p168, %p169
      %p172 = scmp.ne.s32.totalorder %s155, %s171
      %p173 = scmp.eq.s32.totalorder %s29, 0
      %p174 = por %p172, %p173
      %p175 = scmp.le.s32.totalorder 1, %s23
      %p176 = scmp.lt.s32.totalorder %s23, 5
      %p177 = pnand %p175, %p176
      %p178 = pneg %p177
      // Predicated region
      $region9: #{tpu_custom_call.1} parent=5 // pred_check
        _
      $region10: #{tpu_custom_call.1} parent=5 // pred_check_branch
        %180 = sbr.rel (%p177) target = $region12
      $region11: #{tpu_custom_call.1} parent=5 // pred_region
        %s181 = ssub.s32 %s23, 1
      $region12: #{tpu_custom_call.1} parent=5 // pred_fallthru
        _
      %p182 = scmp.lt.s32.totalorder %s23, 4
      // Predicated region
      $region13: #{tpu_custom_call.1} parent=5 // pred_check
        %p183 = pneg %p182
      $region14: #{tpu_custom_call.1} parent=5 // pred_check_branch
        %185 = sbr.rel (%p183) target = $region16
      $region15: #{tpu_custom_call.1} parent=5 // pred_region
        // Predicated region
        $region17: #{tpu_custom_call.1} parent=15 // pred_check
          %p186 = pneg %p55
        $region18: #{tpu_custom_call.1} parent=15 // pred_check_branch
          %188 = sbr.rel (%p186) target = $region20
        $region19: #{tpu_custom_call.1} parent=15 // pred_region
          %p189 = scmp.lt.s32.totalorder %s31, 1
          %s190 = scalar_select %p189, %s31, 1
          %s191 = scalar_lea.vmem %s1, %s190
        $region20: #{tpu_custom_call.1} parent=15 // pred_fallthru
          _
        // Predicated region
        $region21: #{tpu_custom_call.1} parent=15 // pred_check
          %p192 = pneg %p81
        $region22: #{tpu_custom_call.1} parent=15 // pred_check_branch
          %194 = sbr.rel (%p192) target = $region24
        $region23: #{tpu_custom_call.1} parent=15 // pred_region
          %s195 = smul.u32 16, %s30
          %p196 = scmp.lt.s32.totalorder %s195, 31
          %s197 = scalar_select %p196, %s195, 31
          %s198 = smul.addr %s197, 8
          %s199 = scalar_lea.vmem %s2, %s198
          %s200 = smul.u32 16, %s30
        $region24: #{tpu_custom_call.1} parent=15 // pred_fallthru
          _
        // Predicated region
        $region25: #{tpu_custom_call.1} parent=15 // pred_check
          %p201 = pneg %p107
        $region26: #{tpu_custom_call.1} parent=15 // pred_check_branch
          %203 = sbr.rel (%p201) target = $region28
        $region27: #{tpu_custom_call.1} parent=15 // pred_region
          %s204 = smul.u32 16, %s31
          %p205 = scmp.lt.s32.totalorder %s204, 31
          %s206 = scalar_select %p205, %s204, 31
          %s207 = smul.addr %s206, 8
          %s208 = scalar_lea.vmem %s3, %s207
          %s209 = smul.u32 16, %s31
        $region28: #{tpu_custom_call.1} parent=15 // pred_fallthru
          _
        // Predicated region
        $region29: #{tpu_custom_call.1} parent=15 // pred_check
          %p210 = pneg %p135
        $region30: #{tpu_custom_call.1} parent=15 // pred_check_branch
          %212 = sbr.rel (%p210) target = $region32
        $region31: #{tpu_custom_call.1} parent=15 // pred_region
          #allocation12 [shape = 'u32[6]{0}', space=smem, size = 0x18, scoped, tag = 'DMA stride descriptor']
          %s213 = sand.u32 %s125, 1
          %s214 = scalar_lea.sflag [#allocation8], %s213
          %s215 = sand.u32 %s125, 1
          %s216 = smul.addr %s215, 96
          %s217 = scalar_lea.vmem [#allocation7], %s216
          %s218 = smul.u32 4, %s30
          %s220 = ssub.s32 1536, 1536
          %221 = vsyncadd %s214, %s220
          %s222 = smul.addr %s218, 2
          %s223 = sadd.s32 %s31, %s222
          %s224 = smul.addr %s223, 128
          %s225 = scalar_lea.hbm %s4, %s224
          %s227 = sshll.u32 1, 14
          %s228 = sxor.u32 4294967295, %s227
          %s230 = sld [smem:[#allocation0]]
          %s231 = sadd.s32 2, %s230
          %s233 = sshll.u32 7, 26
          %s234 = sxor.u32 4294967295, %s233
          %s235 = sand.u32 0, %s234
          %s236 = sshll.u32 %s231, 26
          %s237 = sor.u32 %s235, %s236
          %s238 = sshll.u32 %s217, 4
          %s239 = int_to_ptr.vmem [resolvable:$true] %s238
          %245 = sst [smem:[#allocation12]] 2048
          %s246 = scalar_lea.smem [#allocation12], 1
          %247 = sst [smem:[%s246]] 512
          %s248 = scalar_lea.smem [#allocation12], 2
          %249 = sst [smem:[%s248]] 4
          %s250 = scalar_lea.smem [#allocation12], 3
          %251 = sst [smem:[%s250]] 256
          %s252 = scalar_lea.smem [#allocation12], 4
          %253 = sst [smem:[%s252]] 128
          %s254 = scalar_lea.smem [#allocation12], 5
          %255 = sst [smem:[%s254]] 8
          %257 = dma.general %s225, 1536, %s239, %s214, [#allocation11], [#allocation12], %s237, 0
        $region32: #{tpu_custom_call.1} parent=15 // pred_fallthru
          _
      $region16: #{tpu_custom_call.1} parent=5 // pred_fallthru
        _
      %p258 = scmp.le.s32.totalorder 1, %s23
      %p259 = scmp.lt.s32.totalorder %s23, 5
      %p260 = pnand %p258, %p259
      %p261 = pneg %p260
      // Predicated region
      $region33: #{tpu_custom_call.1} parent=5 // pred_check
        _
      $region34: #{tpu_custom_call.1} parent=5 // pred_check_branch
        %263 = sbr.rel (%p260) target = $region36
      $region35: #{tpu_custom_call.1} parent=5 // pred_region
        %s264 = ssub.s32 %s23, 1
        %s265 = sand.u32 %s128, 1
        %s266 = scalar_lea.sflag [#allocation8], %s265
        %s267 = sand.u32 %s128, 1
        %s268 = smul.addr %s267, 96
        %s269 = scalar_lea.vmem [#allocation7], %s268
        // Predicated region
        $region37: #{tpu_custom_call.1} parent=35 // pred_check
          %p270 = pneg %p141
        $region38: #{tpu_custom_call.1} parent=35 // pred_check_branch
          %272 = sbr.rel (%p270) target = $region40
        $region39: #{tpu_custom_call.1} parent=35 // pred_region
          %273 = dma.done %s266, 1536
        $region40: #{tpu_custom_call.1} parent=35 // pred_fallthru
          _
        %p274 = scmp.lt.s32.totalorder %s33, 1
        %s275 = scalar_select %p274, %s33, 1
        %s276 = scalar_lea.vmem %s1, %s275
        %p277 = pneg %p61
        %p278 = pneg %p58
        %s279 = smul.u32 16, %s32
        %p280 = scmp.lt.s32.totalorder %s279, 31
        %s281 = scalar_select %p280, %s279, 31
        %s282 = smul.addr %s281, 8
        %s283 = scalar_lea.vmem %s2, %s282
        %p284 = pneg %p87
        %p285 = pneg %p84
        %s286 = smul.u32 16, %s33
        %p287 = scmp.lt.s32.totalorder %s286, 31
        %s288 = scalar_select %p287, %s286, 31
        %s289 = smul.addr %s288, 8
        %s290 = scalar_lea.vmem %s3, %s289
        %p291 = pneg %p113
        %p292 = pneg %p110
        %s293 = sand.u32 %s128, 1
        %s294 = scalar_lea.sflag [#allocation8], %s293
        %s295 = sand.u32 %s128, 1
        %s296 = smul.addr %s295, 96
        %s297 = scalar_lea.vmem [#allocation7], %s296
        %p298 = pneg %p141
        %p299 = pneg %p138
        %p300 = pneg %p167
        %p301 = pneg %p164
        %s302 = sand.u32 %s154, 1
        %s303 = scalar_lea.sflag [#allocation9], %s302
        %s304 = sand.u32 %s154, 1
        %s305 = smul.addr %s304, 128
        %s306 = scalar_lea.vmem [#allocation10], %s305
        %p307 = scmp.lt.s32.totalorder %s33, 1
        %s308 = scalar_select %p307, %s33, 1
        %s309 = scalar_lea.vmem %s1, %s308
        %s310 = smul.u32 16, %s32
        %p311 = scmp.lt.s32.totalorder %s310, 31
        %s312 = scalar_select %p311, %s310, 31
        %s313 = smul.addr %s312, 8
        %s314 = scalar_lea.vmem %s2, %s313
        %s315 = smul.u32 16, %s32
        %s316 = smul.u32 16, %s33
        %p317 = scmp.lt.s32.totalorder %s316, 31
        %s318 = scalar_select %p317, %s316, 31
        %s319 = smul.addr %s318, 8
        %s320 = scalar_lea.vmem %s3, %s319
        %s321 = smul.u32 16, %s33
        %s322 = smul.u32 4, %s32
        %s323 = smul.u32 16, %s32
        %p324 = scmp.eq.s32.totalorder %s33, 0
        // Predicated region
        $region41: #{tpu_custom_call.1} parent=35 // pred_check
          %p325 = pneg %p324
        $region42: #{tpu_custom_call.1} parent=35 // pred_check_branch
          %327 = sbr.rel (%p325) target = $region44
        $region43: #{tpu_custom_call.1} parent=35 // pred_region
          %328 = vst [vmem:[#allocation2] sm:$0xff] 0.0
          %329 = vst [vmem:[#allocation2 + $0x8] sm:$0xff] 0.0
          %330 = vst [vmem:[#allocation2 + $0x10] sm:$0xff] 0.0
          %331 = vst [vmem:[#allocation2 + $0x18] sm:$0xff] 0.0
          %332 = vst [vmem:[#allocation2 + $0x20] sm:$0xff] 0.0
          %333 = vst [vmem:[#allocation2 + $0x28] sm:$0xff] 0.0
          %334 = vst [vmem:[#allocation2 + $0x30] sm:$0xff] 0.0
          %335 = vst [vmem:[#allocation2 + $0x38] sm:$0xff] 0.0
          %336 = vst [vmem:[#allocation2 + $0x40] sm:$0xff] 0.0
          %337 = vst [vmem:[#allocation2 + $0x48] sm:$0xff] 0.0
          %338 = vst [vmem:[#allocation2 + $0x50] sm:$0xff] 0.0
          %339 = vst [vmem:[#allocation2 + $0x58] sm:$0xff] 0.0
          %340 = vst [vmem:[#allocation2 + $0x60] sm:$0xff] 0.0
          %341 = vst [vmem:[#allocation2 + $0x68] sm:$0xff] 0.0
          %342 = vst [vmem:[#allocation2 + $0x70] sm:$0xff] 0.0
          %343 = vst [vmem:[#allocation2 + $0x78] sm:$0xff] 0.0
          %vm344 = vcmask 7168
          %345 = vst.msk [vmem:[#allocation3] sm:$0xff] %vm344, 0.0
          %346 = vst.msk [vmem:[#allocation3 + $0x8] sm:$0xff] %vm344, 0.0
          %347 = vst.msk [vmem:[#allocation3 + $0x10] sm:$0xff] %vm344, 0.0
          %348 = vst.msk [vmem:[#allocation3 + $0x18] sm:$0xff] %vm344, 0.0
          %349 = vst.msk [vmem:[#allocation3 + $0x20] sm:$0xff] %vm344, 0.0
          %350 = vst.msk [vmem:[#allocation3 + $0x28] sm:$0xff] %vm344, 0.0
          %351 = vst.msk [vmem:[#allocation3 + $0x30] sm:$0xff] %vm344, 0.0
          %352 = vst.msk [vmem:[#allocation3 + $0x38] sm:$0xff] %vm344, 0.0
          %353 = vst.msk [vmem:[#allocation3 + $0x40] sm:$0xff] %vm344, 0.0
          %354 = vst.msk [vmem:[#allocation3 + $0x48] sm:$0xff] %vm344, 0.0
          %355 = vst.msk [vmem:[#allocation3 + $0x50] sm:$0xff] %vm344, 0.0
          %356 = vst.msk [vmem:[#allocation3 + $0x58] sm:$0xff] %vm344, 0.0
          %357 = vst.msk [vmem:[#allocation3 + $0x60] sm:$0xff] %vm344, 0.0
          %358 = vst.msk [vmem:[#allocation3 + $0x68] sm:$0xff] %vm344, 0.0
          %359 = vst.msk [vmem:[#allocation3 + $0x70] sm:$0xff] %vm344, 0.0
          %360 = vst.msk [vmem:[#allocation3 + $0x78] sm:$0xff] %vm344, 0.0
          %361 = vst.msk [vmem:[#allocation4] sm:$0xff] %vm344, -1e+30
          %362 = vst.msk [vmem:[#allocation4 + $0x8] sm:$0xff] %vm344, -1e+30
          %363 = vst.msk [vmem:[#allocation4 + $0x10] sm:$0xff] %vm344, -1e+30
          %364 = vst.msk [vmem:[#allocation4 + $0x18] sm:$0xff] %vm344, -1e+30
          %365 = vst.msk [vmem:[#allocation4 + $0x20] sm:$0xff] %vm344, -1e+30
          %366 = vst.msk [vmem:[#allocation4 + $0x28] sm:$0xff] %vm344, -1e+30
          %367 = vst.msk [vmem:[#allocation4 + $0x30] sm:$0xff] %vm344, -1e+30
          %368 = vst.msk [vmem:[#allocation4 + $0x38] sm:$0xff] %vm344, -1e+30
          %369 = vst.msk [vmem:[#allocation4 + $0x40] sm:$0xff] %vm344, -1e+30
          %370 = vst.msk [vmem:[#allocation4 + $0x48] sm:$0xff] %vm344, -1e+30
          %371 = vst.msk [vmem:[#allocation4 + $0x50] sm:$0xff] %vm344, -1e+30
          %372 = vst.msk [vmem:[#allocation4 + $0x58] sm:$0xff] %vm344, -1e+30
          %373 = vst.msk [vmem:[#allocation4 + $0x60] sm:$0xff] %vm344, -1e+30
          %374 = vst.msk [vmem:[#allocation4 + $0x68] sm:$0xff] %vm344, -1e+30
          %375 = vst.msk [vmem:[#allocation4 + $0x70] sm:$0xff] %vm344, -1e+30
          %376 = vst.msk [vmem:[#allocation4 + $0x78] sm:$0xff] %vm344, -1e+30
        $region44: #{tpu_custom_call.1} parent=35 // pred_fallthru
          _
        %v377 = vld [vmem:[%s314] sm:$0xff]
        %v378 = vld [vmem:[%s314 + $0x8] sm:$0xff]
        %v379 = vld [vmem:[%s314 + $0x10] sm:$0xff]
        %v380 = vld [vmem:[%s314 + $0x18] sm:$0xff]
        %v381 = vld [vmem:[%s314 + $0x20] sm:$0xff]
        %v382 = vld [vmem:[%s314 + $0x28] sm:$0xff]
        %v383 = vld [vmem:[%s314 + $0x30] sm:$0xff]
        %v384 = vld [vmem:[%s314 + $0x38] sm:$0xff]
        %v385 = vld [vmem:[%s314 + $0x40] sm:$0xff]
        %v386 = vld [vmem:[%s314 + $0x48] sm:$0xff]
        %v387 = vld [vmem:[%s314 + $0x50] sm:$0xff]
        %v388 = vld [vmem:[%s314 + $0x58] sm:$0xff]
        %v389 = vld [vmem:[%s314 + $0x60] sm:$0xff]
        %v390 = vld [vmem:[%s314 + $0x68] sm:$0xff]
        %v391 = vld [vmem:[%s314 + $0x70] sm:$0xff]
        %v392 = vld [vmem:[%s314 + $0x78] sm:$0xff]
        %v393 = vld [vmem:[%s309] sm:$0x1]
        %395 = vset.pattern.permute.xlu0 0
        %396 = vperm.xlu0 %395, %v377
        %v397 = vpop.permute.xlu0 %396
        %400 = vset.pattern.permute.xlu0 0
        %401 = vperm.xlu0 %400, %v378
        %v402 = vpop.permute.xlu0 %401
        %405 = vset.pattern.permute.xlu0 0
        %406 = vperm.xlu0 %405, %v379
        %v407 = vpop.permute.xlu0 %406
        %410 = vset.pattern.permute.xlu0 0
        %411 = vperm.xlu0 %410, %v380
        %v412 = vpop.permute.xlu0 %411
        %415 = vset.pattern.permute.xlu0 0
        %416 = vperm.xlu0 %415, %v381
        %v417 = vpop.permute.xlu0 %416
        %420 = vset.pattern.permute.xlu0 0
        %421 = vperm.xlu0 %420, %v382
        %v422 = vpop.permute.xlu0 %421
        %425 = vset.pattern.permute.xlu0 0
        %426 = vperm.xlu0 %425, %v383
        %v427 = vpop.permute.xlu0 %426
        %430 = vset.pattern.permute.xlu0 0
        %431 = vperm.xlu0 %430, %v384
        %v432 = vpop.permute.xlu0 %431
        %435 = vset.pattern.permute.xlu0 0
        %436 = vperm.xlu0 %435, %v385
        %v437 = vpop.permute.xlu0 %436
        %440 = vset.pattern.permute.xlu0 0
        %441 = vperm.xlu0 %440, %v386
        %v442 = vpop.permute.xlu0 %441
        %445 = vset.pattern.permute.xlu0 0
        %446 = vperm.xlu0 %445, %v387
        %v447 = vpop.permute.xlu0 %446
        %450 = vset.pattern.permute.xlu0 0
        %451 = vperm.xlu0 %450, %v388
        %v452 = vpop.permute.xlu0 %451
        %455 = vset.pattern.permute.xlu0 0
        %456 = vperm.xlu0 %455, %v389
        %v457 = vpop.permute.xlu0 %456
        %460 = vset.pattern.permute.xlu0 0
        %461 = vperm.xlu0 %460, %v390
        %v462 = vpop.permute.xlu0 %461
        %465 = vset.pattern.permute.xlu0 0
        %466 = vperm.xlu0 %465, %v391
        %v467 = vpop.permute.xlu0 %466
        %470 = vset.pattern.permute.xlu0 0
        %471 = vperm.xlu0 %470, %v392
        %v472 = vpop.permute.xlu0 %471
        %v475 = vlaneseq
        %v476 = vshrl.u32 %v475, 7
        %v477 = vsub.s32 0, %v476
        %v478 = vrot.slane %v393, %v477
        %v480 = vadd.f32 %v397, %v478
        %v481 = vadd.f32 %v402, %v478
        %v482 = vadd.f32 %v407, %v478
        %v483 = vadd.f32 %v412, %v478
        %v484 = vadd.f32 %v417, %v478
        %v485 = vadd.f32 %v422, %v478
        %v486 = vadd.f32 %v427, %v478
        %v487 = vadd.f32 %v432, %v478
        %v488 = vadd.f32 %v437, %v478
        %v489 = vadd.f32 %v442, %v478
        %v490 = vadd.f32 %v447, %v478
        %v491 = vadd.f32 %v452, %v478
        %v492 = vadd.f32 %v457, %v478
        %v493 = vadd.f32 %v462, %v478
        %v494 = vadd.f32 %v467, %v478
        %v495 = vadd.f32 %v472, %v478
        %s496 = sld [smem:[#allocation6]]
        %s497 = sld [smem:[#allocation6 + $0x80]]
        %v498 = vld [vmem:[%s269] sm:$0xff]
        %v499 = vld [vmem:[%s269 + $0x8] sm:$0xff]
        %v500 = vld [vmem:[%s269 + $0x10] sm:$0xff]
        %v501 = vld [vmem:[%s269 + $0x18] sm:$0xff]
        %v502 = vunpack.c.0.s8 %v498
        %v503 = vunpack.c.1.s8 %v498
        %v504 = vunpack.c.2.s8 %v498
        %v505 = vunpack.c.3.s8 %v498
        %v506 = vunpack.c.0.s8 %v499
        %v507 = vunpack.c.1.s8 %v499
        %v508 = vunpack.c.2.s8 %v499
        %v509 = vunpack.c.3.s8 %v499
        %v510 = vunpack.c.0.s8 %v500
        %v511 = vunpack.c.1.s8 %v500
        %v512 = vunpack.c.2.s8 %v500
        %v513 = vunpack.c.3.s8 %v500
        %v514 = vunpack.c.0.s8 %v501
        %v515 = vunpack.c.1.s8 %v501
        %v516 = vunpack.c.2.s8 %v501
        %v517 = vunpack.c.3.s8 %v501
        %v518 = vcvt.s32.f32 %v502
        %v519 = vcvt.s32.f32 %v503
        %v520 = vcvt.s32.f32 %v504
        %v521 = vcvt.s32.f32 %v505
        %v522 = vcvt.s32.f32 %v506
        %v523 = vcvt.s32.f32 %v507
        %v524 = vcvt.s32.f32 %v508
        %v525 = vcvt.s32.f32 %v509
        %v526 = vcvt.s32.f32 %v510
        %v527 = vcvt.s32.f32 %v511
        %v528 = vcvt.s32.f32 %v512
        %v529 = vcvt.s32.f32 %v513
        %v530 = vcvt.s32.f32 %v514
        %v531 = vcvt.s32.f32 %v515
        %v532 = vcvt.s32.f32 %v516
        %v533 = vcvt.s32.f32 %v517
        %vm534 = vcmp.gt.f32.partialorder %v518, 0.0
        %vm535 = vcmp.gt.f32.partialorder %v519, 0.0
        %vm536 = vcmp.gt.f32.partialorder %v520, 0.0
        %vm537 = vcmp.gt.f32.partialorder %v521, 0.0
        %vm538 = vcmp.gt.f32.partialorder %v522, 0.0
        %vm539 = vcmp.gt.f32.partialorder %v523, 0.0
        %vm540 = vcmp.gt.f32.partialorder %v524, 0.0
        %vm541 = vcmp.gt.f32.partialorder %v525, 0.0
        %vm542 = vcmp.gt.f32.partialorder %v526, 0.0
        %vm543 = vcmp.gt.f32.partialorder %v527, 0.0
        %vm544 = vcmp.gt.f32.partialorder %v528, 0.0
        %vm545 = vcmp.gt.f32.partialorder %v529, 0.0
        %vm546 = vcmp.gt.f32.partialorder %v530, 0.0
        %vm547 = vcmp.gt.f32.partialorder %v531, 0.0
        %vm548 = vcmp.gt.f32.partialorder %v532, 0.0
        %vm549 = vcmp.gt.f32.partialorder %v533, 0.0
        %v550 = vstv %s496
        %v551 = vsel %vm534, %v550, -1e+30
        %v552 = vsel %vm535, %v550, -1e+30
        %v553 = vsel %vm536, %v550, -1e+30
        %v554 = vsel %vm537, %v550, -1e+30
        %v555 = vsel %vm538, %v550, -1e+30
        %v556 = vsel %vm539, %v550, -1e+30
        %v557 = vsel %vm540, %v550, -1e+30
        %v558 = vsel %vm541, %v550, -1e+30
        %v559 = vsel %vm542, %v550, -1e+30
        %v560 = vsel %vm543, %v550, -1e+30
        %v561 = vsel %vm544, %v550, -1e+30
        %v562 = vsel %vm545, %v550, -1e+30
        %v563 = vsel %vm546, %v550, -1e+30
        %v564 = vsel %vm547, %v550, -1e+30
        %v565 = vsel %vm548, %v550, -1e+30
        %v566 = vsel %vm549, %v550, -1e+30
        %v567 = vmax.f32 %v551, -1e+30
        %v568 = vmax.f32 %v552, -1e+30
        %v569 = vmax.f32 %v553, -1e+30
        %v570 = vmax.f32 %v554, -1e+30
        %v571 = vmax.f32 %v555, -1e+30
        %v572 = vmax.f32 %v556, -1e+30
        %v573 = vmax.f32 %v557, -1e+30
        %v574 = vmax.f32 %v558, -1e+30
        %v575 = vmax.f32 %v559, -1e+30
        %v576 = vmax.f32 %v560, -1e+30
        %v577 = vmax.f32 %v561, -1e+30
        %v578 = vmax.f32 %v562, -1e+30
        %v579 = vmax.f32 %v563, -1e+30
        %v580 = vmax.f32 %v564, -1e+30
        %v581 = vmax.f32 %v565, -1e+30
        %v582 = vmax.f32 %v566, -1e+30
        %v583 = vstv %s497
        %v584 = vsel %vm534, %v583, 0.0
        %v585 = vsel %vm535, %v583, 0.0
        %v586 = vsel %vm536, %v583, 0.0
        %v587 = vsel %vm537, %v583, 0.0
        %v588 = vsel %vm538, %v583, 0.0
        %v589 = vsel %vm539, %v583, 0.0
        %v590 = vsel %vm540, %v583, 0.0
        %v591 = vsel %vm541, %v583, 0.0
        %v592 = vsel %vm542, %v583, 0.0
        %v593 = vsel %vm543, %v583, 0.0
        %v594 = vsel %vm544, %v583, 0.0
        %v595 = vsel %vm545, %v583, 0.0
        %v596 = vsel %vm546, %v583, 0.0
        %v597 = vsel %vm547, %v583, 0.0
        %v598 = vsel %vm548, %v583, 0.0
        %v599 = vsel %vm549, %v583, 0.0
        %v600 = vadd.f32 %v584, 0.0
        %v601 = vadd.f32 %v585, 0.0
        %v602 = vadd.f32 %v586, 0.0
        %v603 = vadd.f32 %v587, 0.0
        %v604 = vadd.f32 %v588, 0.0
        %v605 = vadd.f32 %v589, 0.0
        %v606 = vadd.f32 %v590, 0.0
        %v607 = vadd.f32 %v591, 0.0
        %v608 = vadd.f32 %v592, 0.0
        %v609 = vadd.f32 %v593, 0.0
        %v610 = vadd.f32 %v594, 0.0
        %v611 = vadd.f32 %v595, 0.0
        %v612 = vadd.f32 %v596, 0.0
        %v613 = vadd.f32 %v597, 0.0
        %v614 = vadd.f32 %v598, 0.0
        %v615 = vadd.f32 %v599, 0.0
        %s616 = sld [smem:[#allocation6 + $0x1]]
        %s617 = sld [smem:[#allocation6 + $0x81]]
        %s618 = scalar_lea.vmem %s269, 32 [#allocation7]
        %v619 = vld [vmem:[%s618] sm:$0xff]
        %v620 = vld [vmem:[%s618 + $0x8] sm:$0xff]
        %v621 = vld [vmem:[%s618 + $0x10] sm:$0xff]
        %v622 = vld [vmem:[%s618 + $0x18] sm:$0xff]
        %v623 = vunpack.c.0.s8 %v619
        %v624 = vunpack.c.1.s8 %v619
        %v625 = vunpack.c.2.s8 %v619
        %v626 = vunpack.c.3.s8 %v619
        %v627 = vunpack.c.0.s8 %v620
        %v628 = vunpack.c.1.s8 %v620
        %v629 = vunpack.c.2.s8 %v620
        %v630 = vunpack.c.3.s8 %v620
        %v631 = vunpack.c.0.s8 %v621
        %v632 = vunpack.c.1.s8 %v621
        %v633 = vunpack.c.2.s8 %v621
        %v634 = vunpack.c.3.s8 %v621
        %v635 = vunpack.c.0.s8 %v622
        %v636 = vunpack.c.1.s8 %v622
        %v637 = vunpack.c.2.s8 %v622
        %v638 = vunpack.c.3.s8 %v622
        %v639 = vcvt.s32.f32 %v623
        %v640 = vcvt.s32.f32 %v624
        %v641 = vcvt.s32.f32 %v625
        %v642 = vcvt.s32.f32 %v626
        %v643 = vcvt.s32.f32 %v627
        %v644 = vcvt.s32.f32 %v628
        %v645 = vcvt.s32.f32 %v629
        %v646 = vcvt.s32.f32 %v630
        %v647 = vcvt.s32.f32 %v631
        %v648 = vcvt.s32.f32 %v632
        %v649 = vcvt.s32.f32 %v633
        %v650 = vcvt.s32.f32 %v634
        %v651 = vcvt.s32.f32 %v635
        %v652 = vcvt.s32.f32 %v636
        %v653 = vcvt.s32.f32 %v637
        %v654 = vcvt.s32.f32 %v638
        %vm655 = vcmp.gt.f32.partialorder %v639, 0.0
        %vm656 = vcmp.gt.f32.partialorder %v640, 0.0
        %vm657 = vcmp.gt.f32.partialorder %v641, 0.0
        %vm658 = vcmp.gt.f32.partialorder %v642, 0.0
        %vm659 = vcmp.gt.f32.partialorder %v643, 0.0
        %vm660 = vcmp.gt.f32.partialorder %v644, 0.0
        %vm661 = vcmp.gt.f32.partialorder %v645, 0.0
        %vm662 = vcmp.gt.f32.partialorder %v646, 0.0
        %vm663 = vcmp.gt.f32.partialorder %v647, 0.0
        %vm664 = vcmp.gt.f32.partialorder %v648, 0.0
        %vm665 = vcmp.gt.f32.partialorder %v649, 0.0
        %vm666 = vcmp.gt.f32.partialorder %v650, 0.0
        %vm667 = vcmp.gt.f32.partialorder %v651, 0.0
        %vm668 = vcmp.gt.f32.partialorder %v652, 0.0
        %vm669 = vcmp.gt.f32.partialorder %v653, 0.0
        %vm670 = vcmp.gt.f32.partialorder %v654, 0.0
        %v671 = vstv %s616
        %v672 = vsel %vm655, %v671, -1e+30
        %v673 = vsel %vm656, %v671, -1e+30
        %v674 = vsel %vm657, %v671, -1e+30
        %v675 = vsel %vm658, %v671, -1e+30
        %v676 = vsel %vm659, %v671, -1e+30
        %v677 = vsel %vm660, %v671, -1e+30
        %v678 = vsel %vm661, %v671, -1e+30
        %v679 = vsel %vm662, %v671, -1e+30
        %v680 = vsel %vm663, %v671, -1e+30
        %v681 = vsel %vm664, %v671, -1e+30
        %v682 = vsel %vm665, %v671, -1e+30
        %v683 = vsel %vm666, %v671, -1e+30
        %v684 = vsel %vm667, %v671, -1e+30
        %v685 = vsel %vm668, %v671, -1e+30
        %v686 = vsel %vm669, %v671, -1e+30
        %v687 = vsel %vm670, %v671, -1e+30
        %v688 = vmax.f32 %v567, %v672
        %v689 = vmax.f32 %v568, %v673
        %v690 = vmax.f32 %v569, %v674
        %v691 = vmax.f32 %v570, %v675
        %v692 = vmax.f32 %v571, %v676
        %v693 = vmax.f32 %v572, %v677
        %v694 = vmax.f32 %v573, %v678
        %v695 = vmax.f32 %v574, %v679
        %v696 = vmax.f32 %v575, %v680
        %v697 = vmax.f32 %v576, %v681
        %v698 = vmax.f32 %v577, %v682
        %v699 = vmax.f32 %v578, %v683
        %v700 = vmax.f32 %v579, %v684
        %v701 = vmax.f32 %v580, %v685
        %v702 = vmax.f32 %v581, %v686
        %v703 = vmax.f32 %v582, %v687
        %v704 = vstv %s617
        %v705 = vsel %vm655, %v704, 0.0
        %v706 = vsel %vm656, %v704, 0.0
        %v707 = vsel %vm657, %v704, 0.0
        %v708 = vsel %vm658, %v704, 0.0
        %v709 = vsel %vm659, %v704, 0.0
        %v710 = vsel %vm660, %v704, 0.0
        %v711 = vsel %vm661, %v704, 0.0
        %v712 = vsel %vm662, %v704, 0.0
        %v713 = vsel %vm663, %v704, 0.0
        %v714 = vsel %vm664, %v704, 0.0
        %v715 = vsel %vm665, %v704, 0.0
        %v716 = vsel %vm666, %v704, 0.0
        %v717 = vsel %vm667, %v704, 0.0
        %v718 = vsel %vm668, %v704, 0.0
        %v719 = vsel %vm669, %v704, 0.0
        %v720 = vsel %vm670, %v704, 0.0
        %v721 = vadd.f32 %v600, %v705
        %v722 = vadd.f32 %v601, %v706
        %v723 = vadd.f32 %v602, %v707
        %v724 = vadd.f32 %v603, %v708
        %v725 = vadd.f32 %v604, %v709
        %v726 = vadd.f32 %v605, %v710
        %v727 = vadd.f32 %v606, %v711
        %v728 = vadd.f32 %v607, %v712
        %v729 = vadd.f32 %v608, %v713
        %v730 = vadd.f32 %v609, %v714
        %v731 = vadd.f32 %v610, %v715
        %v732 = vadd.f32 %v611, %v716
        %v733 = vadd.f32 %v612, %v717
        %v734 = vadd.f32 %v613, %v718
        %v735 = vadd.f32 %v614, %v719
        %v736 = vadd.f32 %v615, %v720
        %s737 = sld [smem:[#allocation6 + $0x2]]
        %s738 = sld [smem:[#allocation6 + $0x82]]
        %s739 = scalar_lea.vmem %s269, 64 [#allocation7]
        %v740 = vld [vmem:[%s739] sm:$0xff]
        %v741 = vld [vmem:[%s739 + $0x8] sm:$0xff]
        %v742 = vld [vmem:[%s739 + $0x10] sm:$0xff]
        %v743 = vld [vmem:[%s739 + $0x18] sm:$0xff]
        %v744 = vunpack.c.0.s8 %v740
        %v745 = vunpack.c.1.s8 %v740
        %v746 = vunpack.c.2.s8 %v740
        %v747 = vunpack.c.3.s8 %v740
        %v748 = vunpack.c.0.s8 %v741
        %v749 = vunpack.c.1.s8 %v741
        %v750 = vunpack.c.2.s8 %v741
        %v751 = vunpack.c.3.s8 %v741
        %v752 = vunpack.c.0.s8 %v742
        %v753 = vunpack.c.1.s8 %v742
        %v754 = vunpack.c.2.s8 %v742
        %v755 = vunpack.c.3.s8 %v742
        %v756 = vunpack.c.0.s8 %v743
        %v757 = vunpack.c.1.s8 %v743
        %v758 = vunpack.c.2.s8 %v743
        %v759 = vunpack.c.3.s8 %v743
        %v760 = vcvt.s32.f32 %v744
        %v761 = vcvt.s32.f32 %v745
        %v762 = vcvt.s32.f32 %v746
        %v763 = vcvt.s32.f32 %v747
        %v764 = vcvt.s32.f32 %v748
        %v765 = vcvt.s32.f32 %v749
        %v766 = vcvt.s32.f32 %v750
        %v767 = vcvt.s32.f32 %v751
        %v768 = vcvt.s32.f32 %v752
        %v769 = vcvt.s32.f32 %v753
        %v770 = vcvt.s32.f32 %v754
        %v771 = vcvt.s32.f32 %v755
        %v772 = vcvt.s32.f32 %v756
        %v773 = vcvt.s32.f32 %v757
        %v774 = vcvt.s32.f32 %v758
        %v775 = vcvt.s32.f32 %v759
        %vm776 = vcmp.gt.f32.partialorder %v760, 0.0
        %vm777 = vcmp.gt.f32.partialorder %v761, 0.0
        %vm778 = vcmp.gt.f32.partialorder %v762, 0.0
        %vm779 = vcmp.gt.f32.partialorder %v763, 0.0
        %vm780 = vcmp.gt.f32.partialorder %v764, 0.0
        %vm781 = vcmp.gt.f32.partialorder %v765, 0.0
        %vm782 = vcmp.gt.f32.partialorder %v766, 0.0
        %vm783 = vcmp.gt.f32.partialorder %v767, 0.0
        %vm784 = vcmp.gt.f32.partialorder %v768, 0.0
        %vm785 = vcmp.gt.f32.partialorder %v769, 0.0
        %vm786 = vcmp.gt.f32.partialorder %v770, 0.0
        %vm787 = vcmp.gt.f32.partialorder %v771, 0.0
        %vm788 = vcmp.gt.f32.partialorder %v772, 0.0
        %vm789 = vcmp.gt.f32.partialorder %v773, 0.0
        %vm790 = vcmp.gt.f32.partialorder %v774, 0.0
        %vm791 = vcmp.gt.f32.partialorder %v775, 0.0
        %v792 = vstv %s737
        %v793 = vsel %vm776, %v792, -1e+30
        %v794 = vsel %vm777, %v792, -1e+30
        %v795 = vsel %vm778, %v792, -1e+30
        %v796 = vsel %vm779, %v792, -1e+30
        %v797 = vsel %vm780, %v792, -1e+30
        %v798 = vsel %vm781, %v792, -1e+30
        %v799 = vsel %vm782, %v792, -1e+30
        %v800 = vsel %vm783, %v792, -1e+30
        %v801 = vsel %vm784, %v792, -1e+30
        %v802 = vsel %vm785, %v792, -1e+30
        %v803 = vsel %vm786, %v792, -1e+30
        %v804 = vsel %vm787, %v792, -1e+30
        %v805 = vsel %vm788, %v792, -1e+30
        %v806 = vsel %vm789, %v792, -1e+30
        %v807 = vsel %vm790, %v792, -1e+30
        %v808 = vsel %vm791, %v792, -1e+30
        %v809 = vmax.f32 %v688, %v793
        %v810 = vmax.f32 %v689, %v794
        %v811 = vmax.f32 %v690, %v795
        %v812 = vmax.f32 %v691, %v796
        %v813 = vmax.f32 %v692, %v797
        %v814 = vmax.f32 %v693, %v798
        %v815 = vmax.f32 %v694, %v799
        %v816 = vmax.f32 %v695, %v800
        %v817 = vmax.f32 %v696, %v801
        %v818 = vmax.f32 %v697, %v802
        %v819 = vmax.f32 %v698, %v803
        %v820 = vmax.f32 %v699, %v804
        %v821 = vmax.f32 %v700, %v805
        %v822 = vmax.f32 %v701, %v806
        %v823 = vmax.f32 %v702, %v807
        %v824 = vmax.f32 %v703, %v808
        %v825 = vstv %s738
        %v826 = vsel %vm776, %v825, 0.0
        %v827 = vsel %vm777, %v825, 0.0
        %v828 = vsel %vm778, %v825, 0.0
        %v829 = vsel %vm779, %v825, 0.0
        %v830 = vsel %vm780, %v825, 0.0
        %v831 = vsel %vm781, %v825, 0.0
        %v832 = vsel %vm782, %v825, 0.0
        %v833 = vsel %vm783, %v825, 0.0
        %v834 = vsel %vm784, %v825, 0.0
        %v835 = vsel %vm785, %v825, 0.0
        %v836 = vsel %vm786, %v825, 0.0
        %v837 = vsel %vm787, %v825, 0.0
        %v838 = vsel %vm788, %v825, 0.0
        %v839 = vsel %vm789, %v825, 0.0
        %v840 = vsel %vm790, %v825, 0.0
        %v841 = vsel %vm791, %v825, 0.0
        %v842 = vadd.f32 %v721, %v826
        %v843 = vadd.f32 %v722, %v827
        %v844 = vadd.f32 %v723, %v828
        %v845 = vadd.f32 %v724, %v829
        %v846 = vadd.f32 %v725, %v830
        %v847 = vadd.f32 %v726, %v831
        %v848 = vadd.f32 %v727, %v832
        %v849 = vadd.f32 %v728, %v833
        %v850 = vadd.f32 %v729, %v834
        %v851 = vadd.f32 %v730, %v835
        %v852 = vadd.f32 %v731, %v836
        %v853 = vadd.f32 %v732, %v837
        %v854 = vadd.f32 %v733, %v838
        %v855 = vadd.f32 %v734, %v839
        %v856 = vadd.f32 %v735, %v840
        %v857 = vadd.f32 %v736, %v841
        %v858 = vld [vmem:[#allocation4] sm:$0xff]
        %v859 = vld [vmem:[#allocation4 + $0x8] sm:$0xff]
        %v860 = vld [vmem:[#allocation4 + $0x10] sm:$0xff]
        %v861 = vld [vmem:[#allocation4 + $0x18] sm:$0xff]
        %v862 = vld [vmem:[#allocation4 + $0x20] sm:$0xff]
        %v863 = vld [vmem:[#allocation4 + $0x28] sm:$0xff]
        %v864 = vld [vmem:[#allocation4 + $0x30] sm:$0xff]
        %v865 = vld [vmem:[#allocation4 + $0x38] sm:$0xff]
        %v866 = vld [vmem:[#allocation4 + $0x40] sm:$0xff]
        %v867 = vld [vmem:[#allocation4 + $0x48] sm:$0xff]
        %v868 = vld [vmem:[#allocation4 + $0x50] sm:$0xff]
        %v869 = vld [vmem:[#allocation4 + $0x58] sm:$0xff]
        %v870 = vld [vmem:[#allocation4 + $0x60] sm:$0xff]
        %v871 = vld [vmem:[#allocation4 + $0x68] sm:$0xff]
        %v872 = vld [vmem:[#allocation4 + $0x70] sm:$0xff]
        %v873 = vld [vmem:[#allocation4 + $0x78] sm:$0xff]
        %v874 = vadd.f32 %v480, %v809
        %v875 = vadd.f32 %v481, %v810
        %v876 = vadd.f32 %v482, %v811
        %v877 = vadd.f32 %v483, %v812
        %v878 = vadd.f32 %v484, %v813
        %v879 = vadd.f32 %v485, %v814
        %v880 = vadd.f32 %v486, %v815
        %v881 = vadd.f32 %v487, %v816
        %v882 = vadd.f32 %v488, %v817
        %v883 = vadd.f32 %v489, %v818
        %v884 = vadd.f32 %v490, %v819
        %v885 = vadd.f32 %v491, %v820
        %v886 = vadd.f32 %v492, %v821
        %v887 = vadd.f32 %v493, %v822
        %v888 = vadd.f32 %v494, %v823
        %v889 = vadd.f32 %v495, %v824
        %890 = vmax.xlane.f32.xlu0 %v874
        %v891 = vpop.xlane.xlu0 %890
        %892 = vmax.xlane.f32.xlu0 %v875
        %v893 = vpop.xlane.xlu0 %892
        %894 = vmax.xlane.f32.xlu0 %v876
        %v895 = vpop.xlane.xlu0 %894
        %896 = vmax.xlane.f32.xlu0 %v877
        %v897 = vpop.xlane.xlu0 %896
        %898 = vmax.xlane.f32.xlu0 %v878
        %v899 = vpop.xlane.xlu0 %898
        %900 = vmax.xlane.f32.xlu0 %v879
        %v901 = vpop.xlane.xlu0 %900
        %902 = vmax.xlane.f32.xlu0 %v880
        %v903 = vpop.xlane.xlu0 %902
        %904 = vmax.xlane.f32.xlu0 %v881
        %v905 = vpop.xlane.xlu0 %904
        %906 = vmax.xlane.f32.xlu0 %v882
        %v907 = vpop.xlane.xlu0 %906
        %908 = vmax.xlane.f32.xlu0 %v883
        %v909 = vpop.xlane.xlu0 %908
        %910 = vmax.xlane.f32.xlu0 %v884
        %v911 = vpop.xlane.xlu0 %910
        %912 = vmax.xlane.f32.xlu0 %v885
        %v913 = vpop.xlane.xlu0 %912
        %914 = vmax.xlane.f32.xlu0 %v886
        %v915 = vpop.xlane.xlu0 %914
        %916 = vmax.xlane.f32.xlu0 %v887
        %v917 = vpop.xlane.xlu0 %916
        %918 = vmax.xlane.f32.xlu0 %v888
        %v919 = vpop.xlane.xlu0 %918
        %920 = vmax.xlane.f32.xlu0 %v889
        %v921 = vpop.xlane.xlu0 %920
        %v922 = vmax.f32 %v858, %v891
        %v923 = vmax.f32 %v859, %v893
        %v924 = vmax.f32 %v860, %v895
        %v925 = vmax.f32 %v861, %v897
        %v926 = vmax.f32 %v862, %v899
        %v927 = vmax.f32 %v863, %v901
        %v928 = vmax.f32 %v864, %v903
        %v929 = vmax.f32 %v865, %v905
        %v930 = vmax.f32 %v866, %v907
        %v931 = vmax.f32 %v867, %v909
        %v932 = vmax.f32 %v868, %v911
        %v933 = vmax.f32 %v869, %v913
        %v934 = vmax.f32 %v870, %v915
        %v935 = vmax.f32 %v871, %v917
        %v936 = vmax.f32 %v872, %v919
        %v937 = vmax.f32 %v873, %v921
        %v938 = vsub.f32 %v858, %v922
        %v939 = vsub.f32 %v859, %v923
        %v940 = vsub.f32 %v860, %v924
        %v941 = vsub.f32 %v861, %v925
        %v942 = vsub.f32 %v862, %v926
        %v943 = vsub.f32 %v863, %v927
        %v944 = vsub.f32 %v864, %v928
        %v945 = vsub.f32 %v865, %v929
        %v946 = vsub.f32 %v866, %v930
        %v947 = vsub.f32 %v867, %v931
        %v948 = vsub.f32 %v868, %v932
        %v949 = vsub.f32 %v869, %v933
        %v950 = vsub.f32 %v870, %v934
        %v951 = vsub.f32 %v871, %v935
        %v952 = vsub.f32 %v872, %v936
        %v953 = vsub.f32 %v873, %v937
        %v954 = vmul.f32 %v938, 1.442695
        %v955 = vpow.pop %v954
        %v956 = vmul.f32 %v939, 1.442695
        %v957 = vpow.pop %v956
        %v958 = vmul.f32 %v940, 1.442695
        %v959 = vpow.pop %v958
        %v960 = vmul.f32 %v941, 1.442695
        %v961 = vpow.pop %v960
        %v962 = vmul.f32 %v942, 1.442695
        %v963 = vpow.pop %v962
        %v964 = vmul.f32 %v943, 1.442695
        %v965 = vpow.pop %v964
        %v966 = vmul.f32 %v944, 1.442695
        %v967 = vpow.pop %v966
        %v968 = vmul.f32 %v945, 1.442695
        %v969 = vpow.pop %v968
        %v970 = vmul.f32 %v946, 1.442695
        %v971 = vpow.pop %v970
        %v972 = vmul.f32 %v947, 1.442695
        %v973 = vpow.pop %v972
        %v974 = vmul.f32 %v948, 1.442695
        %v975 = vpow.pop %v974
        %v976 = vmul.f32 %v949, 1.442695
        %v977 = vpow.pop %v976
        %v978 = vmul.f32 %v950, 1.442695
        %v979 = vpow.pop %v978
        %v980 = vmul.f32 %v951, 1.442695
        %v981 = vpow.pop %v980
        %v982 = vmul.f32 %v952, 1.442695
        %v983 = vpow.pop %v982
        %v984 = vmul.f32 %v953, 1.442695
        %v985 = vpow.pop %v984
        %987 = vset.pattern.permute.xlu0 0
        %988 = vperm.xlu0 %987, %v922
        %v989 = vpop.permute.xlu0 %988
        %992 = vset.pattern.permute.xlu0 0
        %993 = vperm.xlu0 %992, %v923
        %v994 = vpop.permute.xlu0 %993
        %997 = vset.pattern.permute.xlu0 0
        %998 = vperm.xlu0 %997, %v924
        %v999 = vpop.permute.xlu0 %998
        %1002 = vset.pattern.permute.xlu0 0
        %1003 = vperm.xlu0 %1002, %v925
        %v1004 = vpop.permute.xlu0 %1003
        %1007 = vset.pattern.permute.xlu0 0
        %1008 = vperm.xlu0 %1007, %v926
        %v1009 = vpop.permute.xlu0 %1008
        %1012 = vset.pattern.permute.xlu0 0
        %1013 = vperm.xlu0 %1012, %v927
        %v1014 = vpop.permute.xlu0 %1013
        %1017 = vset.pattern.permute.xlu0 0
        %1018 = vperm.xlu0 %1017, %v928
        %v1019 = vpop.permute.xlu0 %1018
        %1022 = vset.pattern.permute.xlu0 0
        %1023 = vperm.xlu0 %1022, %v929
        %v1024 = vpop.permute.xlu0 %1023
        %1027 = vset.pattern.permute.xlu0 0
        %1028 = vperm.xlu0 %1027, %v930
        %v1029 = vpop.permute.xlu0 %1028
        %1032 = vset.pattern.permute.xlu0 0
        %1033 = vperm.xlu0 %1032, %v931
        %v1034 = vpop.permute.xlu0 %1033
        %1037 = vset.pattern.permute.xlu0 0
        %1038 = vperm.xlu0 %1037, %v932
        %v1039 = vpop.permute.xlu0 %1038
        %1042 = vset.pattern.permute.xlu0 0
        %1043 = vperm.xlu0 %1042, %v933
        %v1044 = vpop.permute.xlu0 %1043
        %1047 = vset.pattern.permute.xlu0 0
        %1048 = vperm.xlu0 %1047, %v934
        %v1049 = vpop.permute.xlu0 %1048
        %1052 = vset.pattern.permute.xlu0 0
        %1053 = vperm.xlu0 %1052, %v935
        %v1054 = vpop.permute.xlu0 %1053
        %1057 = vset.pattern.permute.xlu0 0
        %1058 = vperm.xlu0 %1057, %v936
        %v1059 = vpop.permute.xlu0 %1058
        %1062 = vset.pattern.permute.xlu0 0
        %1063 = vperm.xlu0 %1062, %v937
        %v1064 = vpop.permute.xlu0 %1063
        %v1066 = vsub.f32 %v480, %v989
        %v1067 = vsub.f32 %v481, %v994
        %v1068 = vsub.f32 %v482, %v999
        %v1069 = vsub.f32 %v483, %v1004
        %v1070 = vsub.f32 %v484, %v1009
        %v1071 = vsub.f32 %v485, %v1014
        %v1072 = vsub.f32 %v486, %v1019
        %v1073 = vsub.f32 %v487, %v1024
        %v1074 = vsub.f32 %v488, %v1029
        %v1075 = vsub.f32 %v489, %v1034
        %v1076 = vsub.f32 %v490, %v1039
        %v1077 = vsub.f32 %v491, %v1044
        %v1078 = vsub.f32 %v492, %v1049
        %v1079 = vsub.f32 %v493, %v1054
        %v1080 = vsub.f32 %v494, %v1059
        %v1081 = vsub.f32 %v495, %v1064
        %v1082 = vmul.f32 %v1066, 1.442695
        %v1083 = vpow.pop %v1082
        %v1084 = vmul.f32 %v1067, 1.442695
        %v1085 = vpow.pop %v1084
        %v1086 = vmul.f32 %v1068, 1.442695
        %v1087 = vpow.pop %v1086
        %v1088 = vmul.f32 %v1069, 1.442695
        %v1089 = vpow.pop %v1088
        %v1090 = vmul.f32 %v1070, 1.442695
        %v1091 = vpow.pop %v1090
        %v1092 = vmul.f32 %v1071, 1.442695
        %v1093 = vpow.pop %v1092
        %v1094 = vmul.f32 %v1072, 1.442695
        %v1095 = vpow.pop %v1094
        %v1096 = vmul.f32 %v1073, 1.442695
        %v1097 = vpow.pop %v1096
        %v1098 = vmul.f32 %v1074, 1.442695
        %v1099 = vpow.pop %v1098
        %v1100 = vmul.f32 %v1075, 1.442695
        %v1101 = vpow.pop %v1100
        %v1102 = vmul.f32 %v1076, 1.442695
        %v1103 = vpow.pop %v1102
        %v1104 = vmul.f32 %v1077, 1.442695
        %v1105 = vpow.pop %v1104
        %v1106 = vmul.f32 %v1078, 1.442695
        %v1107 = vpow.pop %v1106
        %v1108 = vmul.f32 %v1079, 1.442695
        %v1109 = vpow.pop %v1108
        %v1110 = vmul.f32 %v1080, 1.442695
        %v1111 = vpow.pop %v1110
        %v1112 = vmul.f32 %v1081, 1.442695
        %v1113 = vpow.pop %v1112
        %vm1114 = vcmp.gt.f32.partialorder %v842, 0.0
        %vm1115 = vcmp.gt.f32.partialorder %v843, 0.0
        %vm1116 = vcmp.gt.f32.partialorder %v844, 0.0
        %vm1117 = vcmp.gt.f32.partialorder %v845, 0.0
        %vm1118 = vcmp.gt.f32.partialorder %v846, 0.0
        %vm1119 = vcmp.gt.f32.partialorder %v847, 0.0
        %vm1120 = vcmp.gt.f32.partialorder %v848, 0.0
        %vm1121 = vcmp.gt.f32.partialorder %v849, 0.0
        %vm1122 = vcmp.gt.f32.partialorder %v850, 0.0
        %vm1123 = vcmp.gt.f32.partialorder %v851, 0.0
        %vm1124 = vcmp.gt.f32.partialorder %v852, 0.0
        %vm1125 = vcmp.gt.f32.partialorder %v853, 0.0
        %vm1126 = vcmp.gt.f32.partialorder %v854, 0.0
        %vm1127 = vcmp.gt.f32.partialorder %v855, 0.0
        %vm1128 = vcmp.gt.f32.partialorder %v856, 0.0
        %vm1129 = vcmp.gt.f32.partialorder %v857, 0.0
        %v1130 = vmul.f32 %v1083, %v842
        %v1131 = vmul.f32 %v1085, %v843
        %v1132 = vmul.f32 %v1087, %v844
        %v1133 = vmul.f32 %v1089, %v845
        %v1134 = vmul.f32 %v1091, %v846
        %v1135 = vmul.f32 %v1093, %v847
        %v1136 = vmul.f32 %v1095, %v848
        %v1137 = vmul.f32 %v1097, %v849
        %v1138 = vmul.f32 %v1099, %v850
        %v1139 = vmul.f32 %v1101, %v851
        %v1140 = vmul.f32 %v1103, %v852
        %v1141 = vmul.f32 %v1105, %v853
        %v1142 = vmul.f32 %v1107, %v854
        %v1143 = vmul.f32 %v1109, %v855
        %v1144 = vmul.f32 %v1111, %v856
        %v1145 = vmul.f32 %v1113, %v857
        %v1146 = vsel %vm1114, %v1130, 0.0
        %v1147 = vsel %vm1115, %v1131, 0.0
        %v1148 = vsel %vm1116, %v1132, 0.0
        %v1149 = vsel %vm1117, %v1133, 0.0
        %v1150 = vsel %vm1118, %v1134, 0.0
        %v1151 = vsel %vm1119, %v1135, 0.0
        %v1152 = vsel %vm1120, %v1136, 0.0
        %v1153 = vsel %vm1121, %v1137, 0.0
        %v1154 = vsel %vm1122, %v1138, 0.0
        %v1155 = vsel %vm1123, %v1139, 0.0
        %v1156 = vsel %vm1124, %v1140, 0.0
        %v1157 = vsel %vm1125, %v1141, 0.0
        %v1158 = vsel %vm1126, %v1142, 0.0
        %v1159 = vsel %vm1127, %v1143, 0.0
        %v1160 = vsel %vm1128, %v1144, 0.0
        %v1161 = vsel %vm1129, %v1145, 0.0
        %v1162 = vld [vmem:[%s320] sm:$0xff]
        %v1163 = vld [vmem:[%s320 + $0x8] sm:$0xff]
        %v1164 = vld [vmem:[%s320 + $0x10] sm:$0xff]
        %v1165 = vld [vmem:[%s320 + $0x18] sm:$0xff]
        %v1166 = vld [vmem:[%s320 + $0x20] sm:$0xff]
        %v1167 = vld [vmem:[%s320 + $0x28] sm:$0xff]
        %v1168 = vld [vmem:[%s320 + $0x30] sm:$0xff]
        %v1169 = vld [vmem:[%s320 + $0x38] sm:$0xff]
        %v1170 = vld [vmem:[%s320 + $0x40] sm:$0xff]
        %v1171 = vld [vmem:[%s320 + $0x48] sm:$0xff]
        %v1172 = vld [vmem:[%s320 + $0x50] sm:$0xff]
        %v1173 = vld [vmem:[%s320 + $0x58] sm:$0xff]
        %v1174 = vld [vmem:[%s320 + $0x60] sm:$0xff]
        %v1175 = vld [vmem:[%s320 + $0x68] sm:$0xff]
        %v1176 = vld [vmem:[%s320 + $0x70] sm:$0xff]
        %v1177 = vld [vmem:[%s320 + $0x78] sm:$0xff]
        %v1178 = vld [vmem:[#allocation3] sm:$0xff]
        %v1179 = vld [vmem:[#allocation3 + $0x8] sm:$0xff]
        %v1180 = vld [vmem:[#allocation3 + $0x10] sm:$0xff]
        %v1181 = vld [vmem:[#allocation3 + $0x18] sm:$0xff]
        %v1182 = vld [vmem:[#allocation3 + $0x20] sm:$0xff]
        %v1183 = vld [vmem:[#allocation3 + $0x28] sm:$0xff]
        %v1184 = vld [vmem:[#allocation3 + $0x30] sm:$0xff]
        %v1185 = vld [vmem:[#allocation3 + $0x38] sm:$0xff]
        %v1186 = vld [vmem:[#allocation3 + $0x40] sm:$0xff]
        %v1187 = vld [vmem:[#allocation3 + $0x48] sm:$0xff]
        %v1188 = vld [vmem:[#allocation3 + $0x50] sm:$0xff]
        %v1189 = vld [vmem:[#allocation3 + $0x58] sm:$0xff]
        %v1190 = vld [vmem:[#allocation3 + $0x60] sm:$0xff]
        %v1191 = vld [vmem:[#allocation3 + $0x68] sm:$0xff]
        %v1192 = vld [vmem:[#allocation3 + $0x70] sm:$0xff]
        %v1193 = vld [vmem:[#allocation3 + $0x78] sm:$0xff]
        %v1194 = vmul.f32 %v1178, %v955
        %v1195 = vmul.f32 %v1179, %v957
        %v1196 = vmul.f32 %v1180, %v959
        %v1197 = vmul.f32 %v1181, %v961
        %v1198 = vmul.f32 %v1182, %v963
        %v1199 = vmul.f32 %v1183, %v965
        %v1200 = vmul.f32 %v1184, %v967
        %v1201 = vmul.f32 %v1185, %v969
        %v1202 = vmul.f32 %v1186, %v971
        %v1203 = vmul.f32 %v1187, %v973
        %v1204 = vmul.f32 %v1188, %v975
        %v1205 = vmul.f32 %v1189, %v977
        %v1206 = vmul.f32 %v1190, %v979
        %v1207 = vmul.f32 %v1191, %v981
        %v1208 = vmul.f32 %v1192, %v983
        %v1209 = vmul.f32 %v1193, %v985
        %1210 = vadd.xlane.f32.xlu0 %v1146
        %v1211 = vpop.xlane.xlu0 %1210
        %1212 = vadd.xlane.f32.xlu0 %v1147
        %v1213 = vpop.xlane.xlu0 %1212
        %1214 = vadd.xlane.f32.xlu0 %v1148
        %v1215 = vpop.xlane.xlu0 %1214
        %1216 = vadd.xlane.f32.xlu0 %v1149
        %v1217 = vpop.xlane.xlu0 %1216
        %1218 = vadd.xlane.f32.xlu0 %v1150
        %v1219 = vpop.xlane.xlu0 %1218
        %1220 = vadd.xlane.f32.xlu0 %v1151
        %v1221 = vpop.xlane.xlu0 %1220
        %1222 = vadd.xlane.f32.xlu0 %v1152
        %v1223 = vpop.xlane.xlu0 %1222
        %1224 = vadd.xlane.f32.xlu0 %v1153
        %v1225 = vpop.xlane.xlu0 %1224
        %1226 = vadd.xlane.f32.xlu0 %v1154
        %v1227 = vpop.xlane.xlu0 %1226
        %1228 = vadd.xlane.f32.xlu0 %v1155
        %v1229 = vpop.xlane.xlu0 %1228
        %1230 = vadd.xlane.f32.xlu0 %v1156
        %v1231 = vpop.xlane.xlu0 %1230
        %1232 = vadd.xlane.f32.xlu0 %v1157
        %v1233 = vpop.xlane.xlu0 %1232
        %1234 = vadd.xlane.f32.xlu0 %v1158
        %v1235 = vpop.xlane.xlu0 %1234
        %1236 = vadd.xlane.f32.xlu0 %v1159
        %v1237 = vpop.xlane.xlu0 %1236
        %1238 = vadd.xlane.f32.xlu0 %v1160
        %v1239 = vpop.xlane.xlu0 %1238
        %1240 = vadd.xlane.f32.xlu0 %v1161
        %v1241 = vpop.xlane.xlu0 %1240
        %v1242 = vadd.f32 %v1194, %v1211
        %v1243 = vadd.f32 %v1195, %v1213
        %v1244 = vadd.f32 %v1196, %v1215
        %v1245 = vadd.f32 %v1197, %v1217
        %v1246 = vadd.f32 %v1198, %v1219
        %v1247 = vadd.f32 %v1199, %v1221
        %v1248 = vadd.f32 %v1200, %v1223
        %v1249 = vadd.f32 %v1201, %v1225
        %v1250 = vadd.f32 %v1202, %v1227
        %v1251 = vadd.f32 %v1203, %v1229
        %v1252 = vadd.f32 %v1204, %v1231
        %v1253 = vadd.f32 %v1205, %v1233
        %v1254 = vadd.f32 %v1206, %v1235
        %v1255 = vadd.f32 %v1207, %v1237
        %v1256 = vadd.f32 %v1208, %v1239
        %v1257 = vadd.f32 %v1209, %v1241
        %vm1258 = vcmask 7168
        %1259 = vst.msk [vmem:[#allocation3] sm:$0xff] %vm1258, %v1242
        %1260 = vst.msk [vmem:[#allocation3 + $0x8] sm:$0xff] %vm1258, %v1243
        %1261 = vst.msk [vmem:[#allocation3 + $0x10] sm:$0xff] %vm1258, %v1244
        %1262 = vst.msk [vmem:[#allocation3 + $0x18] sm:$0xff] %vm1258, %v1245
        %1263 = vst.msk [vmem:[#allocation3 + $0x20] sm:$0xff] %vm1258, %v1246
        %1264 = vst.msk [vmem:[#allocation3 + $0x28] sm:$0xff] %vm1258, %v1247
        %1265 = vst.msk [vmem:[#allocation3 + $0x30] sm:$0xff] %vm1258, %v1248
        %1266 = vst.msk [vmem:[#allocation3 + $0x38] sm:$0xff] %vm1258, %v1249
        %1267 = vst.msk [vmem:[#allocation3 + $0x40] sm:$0xff] %vm1258, %v1250
        %1268 = vst.msk [vmem:[#allocation3 + $0x48] sm:$0xff] %vm1258, %v1251
        %1269 = vst.msk [vmem:[#allocation3 + $0x50] sm:$0xff] %vm1258, %v1252
        %1270 = vst.msk [vmem:[#allocation3 + $0x58] sm:$0xff] %vm1258, %v1253
        %1271 = vst.msk [vmem:[#allocation3 + $0x60] sm:$0xff] %vm1258, %v1254
        %1272 = vst.msk [vmem:[#allocation3 + $0x68] sm:$0xff] %vm1258, %v1255
        %1273 = vst.msk [vmem:[#allocation3 + $0x70] sm:$0xff] %vm1258, %v1256
        %1274 = vst.msk [vmem:[#allocation3 + $0x78] sm:$0xff] %vm1258, %v1257
        %v1275 = vld [vmem:[#allocation2] sm:$0xff]
        %v1276 = vld [vmem:[#allocation2 + $0x8] sm:$0xff]
        %v1277 = vld [vmem:[#allocation2 + $0x10] sm:$0xff]
        %v1278 = vld [vmem:[#allocation2 + $0x18] sm:$0xff]
        %v1279 = vld [vmem:[#allocation2 + $0x20] sm:$0xff]
        %v1280 = vld [vmem:[#allocation2 + $0x28] sm:$0xff]
        %v1281 = vld [vmem:[#allocation2 + $0x30] sm:$0xff]
        %v1282 = vld [vmem:[#allocation2 + $0x38] sm:$0xff]
        %v1283 = vld [vmem:[#allocation2 + $0x40] sm:$0xff]
        %v1284 = vld [vmem:[#allocation2 + $0x48] sm:$0xff]
        %v1285 = vld [vmem:[#allocation2 + $0x50] sm:$0xff]
        %v1286 = vld [vmem:[#allocation2 + $0x58] sm:$0xff]
        %v1287 = vld [vmem:[#allocation2 + $0x60] sm:$0xff]
        %v1288 = vld [vmem:[#allocation2 + $0x68] sm:$0xff]
        %v1289 = vld [vmem:[#allocation2 + $0x70] sm:$0xff]
        %v1290 = vld [vmem:[#allocation2 + $0x78] sm:$0xff]
        %1292 = vset.pattern.permute.xlu0 0
        %1293 = vperm.xlu0 %1292, %v955
        %v1294 = vpop.permute.xlu0 %1293
        %1297 = vset.pattern.permute.xlu0 0
        %1298 = vperm.xlu0 %1297, %v957
        %v1299 = vpop.permute.xlu0 %1298
        %1302 = vset.pattern.permute.xlu0 0
        %1303 = vperm.xlu0 %1302, %v959
        %v1304 = vpop.permute.xlu0 %1303
        %1307 = vset.pattern.permute.xlu0 0
        %1308 = vperm.xlu0 %1307, %v961
        %v1309 = vpop.permute.xlu0 %1308
        %1312 = vset.pattern.permute.xlu0 0
        %1313 = vperm.xlu0 %1312, %v963
        %v1314 = vpop.permute.xlu0 %1313
        %1317 = vset.pattern.permute.xlu0 0
        %1318 = vperm.xlu0 %1317, %v965
        %v1319 = vpop.permute.xlu0 %1318
        %1322 = vset.pattern.permute.xlu0 0
        %1323 = vperm.xlu0 %1322, %v967
        %v1324 = vpop.permute.xlu0 %1323
        %1327 = vset.pattern.permute.xlu0 0
        %1328 = vperm.xlu0 %1327, %v969
        %v1329 = vpop.permute.xlu0 %1328
        %1332 = vset.pattern.permute.xlu0 0
        %1333 = vperm.xlu0 %1332, %v971
        %v1334 = vpop.permute.xlu0 %1333
        %1337 = vset.pattern.permute.xlu0 0
        %1338 = vperm.xlu0 %1337, %v973
        %v1339 = vpop.permute.xlu0 %1338
        %1342 = vset.pattern.permute.xlu0 0
        %1343 = vperm.xlu0 %1342, %v975
        %v1344 = vpop.permute.xlu0 %1343
        %1347 = vset.pattern.permute.xlu0 0
        %1348 = vperm.xlu0 %1347, %v977
        %v1349 = vpop.permute.xlu0 %1348
        %1352 = vset.pattern.permute.xlu0 0
        %1353 = vperm.xlu0 %1352, %v979
        %v1354 = vpop.permute.xlu0 %1353
        %1357 = vset.pattern.permute.xlu0 0
        %1358 = vperm.xlu0 %1357, %v981
        %v1359 = vpop.permute.xlu0 %1358
        %1362 = vset.pattern.permute.xlu0 0
        %1363 = vperm.xlu0 %1362, %v983
        %v1364 = vpop.permute.xlu0 %1363
        %1367 = vset.pattern.permute.xlu0 0
        %1368 = vperm.xlu0 %1367, %v985
        %v1369 = vpop.permute.xlu0 %1368
        %v1371 = vmul.f32 %v1275, %v1294
        %v1372 = vmul.f32 %v1276, %v1299
        %v1373 = vmul.f32 %v1277, %v1304
        %v1374 = vmul.f32 %v1278, %v1309
        %v1375 = vmul.f32 %v1279, %v1314
        %v1376 = vmul.f32 %v1280, %v1319
        %v1377 = vmul.f32 %v1281, %v1324
        %v1378 = vmul.f32 %v1282, %v1329
        %v1379 = vmul.f32 %v1283, %v1334
        %v1380 = vmul.f32 %v1284, %v1339
        %v1381 = vmul.f32 %v1285, %v1344
        %v1382 = vmul.f32 %v1286, %v1349
        %v1383 = vmul.f32 %v1287, %v1354
        %v1384 = vmul.f32 %v1288, %v1359
        %v1385 = vmul.f32 %v1289, %v1364
        %v1386 = vmul.f32 %v1290, %v1369
        %1387 = vmatprep.subr.mxu0 0.0
        %1388 = vmatpush1.msra.mxu0 %v1162
        %1389 = vmatprep.subr.mxu0 0.0
        %1390 = vmatpush1.msra.mxu0 %v1163
        %1391 = vmatprep.subr.mxu0 0.0
        %1392 = vmatpush1.msra.mxu0 %v1164
        %1393 = vmatprep.subr.mxu0 0.0
        %1394 = vmatpush1.msra.mxu0 %v1165
        %1395 = vmatprep.subr.mxu0 0.0
        %1396 = vmatpush1.msra.mxu0 %v1166
        %1397 = vmatprep.subr.mxu0 0.0
        %1398 = vmatpush1.msra.mxu0 %v1167
        %1399 = vmatprep.subr.mxu0 0.0
        %1400 = vmatpush1.msra.mxu0 %v1168
        %1401 = vmatprep.subr.mxu0 0.0
        %1402 = vmatpush1.msra.mxu0 %v1169
        %1403 = vmatprep.subr.mxu0 0.0
        %1404 = vmatpush1.msra.mxu0 %v1170
        %1405 = vmatprep.subr.mxu0 0.0
        %1406 = vmatpush1.msra.mxu0 %v1171
        %1407 = vmatprep.subr.mxu0 0.0
        %1408 = vmatpush1.msra.mxu0 %v1172
        %1409 = vmatprep.subr.mxu0 0.0
        %1410 = vmatpush1.msra.mxu0 %v1173
        %1411 = vmatprep.subr.mxu0 0.0
        %1412 = vmatpush1.msra.mxu0 %v1174
        %1413 = vmatprep.subr.mxu0 0.0
        %1414 = vmatpush1.msra.mxu0 %v1175
        %1415 = vmatprep.subr.mxu0 0.0
        %1416 = vmatpush1.msra.mxu0 %v1176
        %1417 = vmatprep.subr.mxu0 0.0
        %1418 = vmatpush1.msra.mxu0 %v1177
        %1419 = vmatprep.subr.mxu0 0.0
        %1420 = vmatpush1.msra.mxu0 0.0
        %1421 = vmatprep.subr.mxu0 0.0
        %1422 = vmatpush1.msra.mxu0 0.0
        %1423 = vmatprep.subr.mxu0 0.0
        %1424 = vmatpush1.msra.mxu0 0.0
        %1425 = vmatprep.subr.mxu0 0.0
        %1426 = vmatpush1.msra.mxu0 0.0
        %1427 = vmatprep.subr.mxu0 0.0
        %1428 = vmatpush1.msra.mxu0 0.0
        %1429 = vmatprep.subr.mxu0 0.0
        %1430 = vmatpush1.msra.mxu0 0.0
        %1431 = vmatprep.subr.mxu0 0.0
        %1432 = vmatpush1.msra.mxu0 0.0
        %1433 = vmatprep.subr.mxu0 0.0
        %1434 = vmatpush1.msra.mxu0 0.0
        %1435 = vmatprep.subr.mxu0 0.0
        %1436 = vmatpush1.msra.mxu0 0.0
        %1437 = vmatprep.subr.mxu0 0.0
        %1438 = vmatpush1.msra.mxu0 0.0
        %1439 = vmatprep.subr.mxu0 0.0
        %1440 = vmatpush1.msra.mxu0 0.0
        %1441 = vmatprep.subr.mxu0 0.0
        %1442 = vmatpush1.msra.mxu0 0.0
        %1443 = vmatprep.subr.mxu0 0.0
        %1444 = vmatpush1.msra.mxu0 0.0
        %1445 = vmatprep.subr.mxu0 0.0
        %1446 = vmatpush1.msra.mxu0 0.0
        %1447 = vmatprep.subr.mxu0 0.0
        %1448 = vmatpush1.msra.mxu0 0.0
        %1449 = vmatprep.subr.mxu0 0.0
        %1450 = vmatpush1.msra.mxu0 0.0
        %1451 = vmatprep.mubr.f32.mxu0 0.0
        %1452 = vmatmul.mubr.f32.gmra.mrb[0].mxu0 %v1146
        %v1453 = vpop.f32.mrb[0].mxu0
        %v1454 = vadd.f32 0.0, %v1453
        %v1455 = vpop.f32.mrb[0].mxu0
        %1456 = vmatprep.mubr.f32.mxu0 0.0
        %1457 = vmatmul.mubr.f32.gmra.mrb[0].mxu0 %v1147
        %v1458 = vpop.f32.mrb[0].mxu0
        %v1459 = vadd.f32 0.0, %v1458
        %v1460 = vpop.f32.mrb[0].mxu0
        %1461 = vmatprep.mubr.f32.mxu0 0.0
        %1462 = vmatmul.mubr.f32.gmra.mrb[0].mxu0 %v1148
        %v1463 = vpop.f32.mrb[0].mxu0
        %v1464 = vadd.f32 0.0, %v1463
        %v1465 = vpop.f32.mrb[0].mxu0
        %1466 = vmatprep.mubr.f32.mxu0 0.0
        %1467 = vmatmul.mubr.f32.gmra.mrb[0].mxu0 %v1149
        %v1468 = vpop.f32.mrb[0].mxu0
        %v1469 = vadd.f32 0.0, %v1468
        %v1470 = vpop.f32.mrb[0].mxu0
        %1471 = vmatprep.mubr.f32.mxu0 0.0
        %1472 = vmatmul.mubr.f32.gmra.mrb[0].mxu0 %v1150
        %v1473 = vpop.f32.mrb[0].mxu0
        %v1474 = vadd.f32 0.0, %v1473
        %v1475 = vpop.f32.mrb[0].mxu0
        %1476 = vmatprep.mubr.f32.mxu0 0.0
        %1477 = vmatmul.mubr.f32.gmra.mrb[0].mxu0 %v1151
        %v1478 = vpop.f32.mrb[0].mxu0
        %v1479 = vadd.f32 0.0, %v1478
        %v1480 = vpop.f32.mrb[0].mxu0
        %1481 = vmatprep.mubr.f32.mxu0 0.0
        %1482 = vmatmul.mubr.f32.gmra.mrb[0].mxu0 %v1152
        %v1483 = vpop.f32.mrb[0].mxu0
        %v1484 = vadd.f32 0.0, %v1483
        %v1485 = vpop.f32.mrb[0].mxu0
        %1486 = vmatprep.mubr.f32.mxu0 0.0
        %1487 = vmatmul.mubr.f32.gmra.mrb[0].mxu0 %v1153
        %v1488 = vpop.f32.mrb[0].mxu0
        %v1489 = vadd.f32 0.0, %v1488
        %v1490 = vpop.f32.mrb[0].mxu0
        %1491 = vmatprep.mubr.f32.mxu0 0.0
        %1492 = vmatmul.mubr.f32.gmra.mrb[0].mxu0 %v1154
        %v1493 = vpop.f32.mrb[0].mxu0
        %v1494 = vadd.f32 0.0, %v1493
        %v1495 = vpop.f32.mrb[0].mxu0
        %1496 = vmatprep.mubr.f32.mxu0 0.0
        %1497 = vmatmul.mubr.f32.gmra.mrb[0].mxu0 %v1155
        %v1498 = vpop.f32.mrb[0].mxu0
        %v1499 = vadd.f32 0.0, %v1498
        %v1500 = vpop.f32.mrb[0].mxu0
        %1501 = vmatprep.mubr.f32.mxu0 0.0
        %1502 = vmatmul.mubr.f32.gmra.mrb[0].mxu0 %v1156
        %v1503 = vpop.f32.mrb[0].mxu0
        %v1504 = vadd.f32 0.0, %v1503
        %v1505 = vpop.f32.mrb[0].mxu0
        %1506 = vmatprep.mubr.f32.mxu0 0.0
        %1507 = vmatmul.mubr.f32.gmra.mrb[0].mxu0 %v1157
        %v1508 = vpop.f32.mrb[0].mxu0
        %v1509 = vadd.f32 0.0, %v1508
        %v1510 = vpop.f32.mrb[0].mxu0
        %1511 = vmatprep.mubr.f32.mxu0 0.0
        %1512 = vmatmul.mubr.f32.gmra.mrb[0].mxu0 %v1158
        %v1513 = vpop.f32.mrb[0].mxu0
        %v1514 = vadd.f32 0.0, %v1513
        %v1515 = vpop.f32.mrb[0].mxu0
        %1516 = vmatprep.mubr.f32.mxu0 0.0
        %1517 = vmatmul.mubr.f32.gmra.mrb[0].mxu0 %v1159
        %v1518 = vpop.f32.mrb[0].mxu0
        %v1519 = vadd.f32 0.0, %v1518
        %v1520 = vpop.f32.mrb[0].mxu0
        %1521 = vmatprep.mubr.f32.mxu0 0.0
        %1522 = vmatmul.mubr.f32.gmra.mrb[0].mxu0 %v1160
        %v1523 = vpop.f32.mrb[0].mxu0
        %v1524 = vadd.f32 0.0, %v1523
        %v1525 = vpop.f32.mrb[0].mxu0
        %1526 = vmatprep.mubr.f32.mxu0 0.0
        %1527 = vmatmul.mubr.f32.gmra.mrb[0].mxu0 %v1161
        %v1528 = vpop.f32.mrb[0].mxu0
        %v1529 = vadd.f32 0.0, %v1528
        %v1530 = vpop.f32.mrb[0].mxu0
        %1531 = vdwg.mxu0
        %v1532 = vadd.f32 %v1371, %v1454
        %v1533 = vadd.f32 %v1372, %v1459
        %v1534 = vadd.f32 %v1373, %v1464
        %v1535 = vadd.f32 %v1374, %v1469
        %v1536 = vadd.f32 %v1375, %v1474
        %v1537 = vadd.f32 %v1376, %v1479
        %v1538 = vadd.f32 %v1377, %v1484
        %v1539 = vadd.f32 %v1378, %v1489
        %v1540 = vadd.f32 %v1379, %v1494
        %v1541 = vadd.f32 %v1380, %v1499
        %v1542 = vadd.f32 %v1381, %v1504
        %v1543 = vadd.f32 %v1382, %v1509
        %v1544 = vadd.f32 %v1383, %v1514
        %v1545 = vadd.f32 %v1384, %v1519
        %v1546 = vadd.f32 %v1385, %v1524
        %v1547 = vadd.f32 %v1386, %v1529
        %1548 = vst [vmem:[#allocation2] sm:$0xff] %v1532
        %1549 = vst [vmem:[#allocation2 + $0x8] sm:$0xff] %v1533
        %1550 = vst [vmem:[#allocation2 + $0x10] sm:$0xff] %v1534
        %1551 = vst [vmem:[#allocation2 + $0x18] sm:$0xff] %v1535
        %1552 = vst [vmem:[#allocation2 + $0x20] sm:$0xff] %v1536
        %1553 = vst [vmem:[#allocation2 + $0x28] sm:$0xff] %v1537
        %1554 = vst [vmem:[#allocation2 + $0x30] sm:$0xff] %v1538
        %1555 = vst [vmem:[#allocation2 + $0x38] sm:$0xff] %v1539
        %1556 = vst [vmem:[#allocation2 + $0x40] sm:$0xff] %v1540
        %1557 = vst [vmem:[#allocation2 + $0x48] sm:$0xff] %v1541
        %1558 = vst [vmem:[#allocation2 + $0x50] sm:$0xff] %v1542
        %1559 = vst [vmem:[#allocation2 + $0x58] sm:$0xff] %v1543
        %1560 = vst [vmem:[#allocation2 + $0x60] sm:$0xff] %v1544
        %1561 = vst [vmem:[#allocation2 + $0x68] sm:$0xff] %v1545
        %1562 = vst [vmem:[#allocation2 + $0x70] sm:$0xff] %v1546
        %1563 = vst [vmem:[#allocation2 + $0x78] sm:$0xff] %v1547
        %1564 = vst.msk [vmem:[#allocation4] sm:$0xff] %vm1258, %v922
        %1565 = vst.msk [vmem:[#allocation4 + $0x8] sm:$0xff] %vm1258, %v923
        %1566 = vst.msk [vmem:[#allocation4 + $0x10] sm:$0xff] %vm1258, %v924
        %1567 = vst.msk [vmem:[#allocation4 + $0x18] sm:$0xff] %vm1258, %v925
        %1568 = vst.msk [vmem:[#allocation4 + $0x20] sm:$0xff] %vm1258, %v926
        %1569 = vst.msk [vmem:[#allocation4 + $0x28] sm:$0xff] %vm1258, %v927
        %1570 = vst.msk [vmem:[#allocation4 + $0x30] sm:$0xff] %vm1258, %v928
        %1571 = vst.msk [vmem:[#allocation4 + $0x38] sm:$0xff] %vm1258, %v929
        %1572 = vst.msk [vmem:[#allocation4 + $0x40] sm:$0xff] %vm1258, %v930
        %1573 = vst.msk [vmem:[#allocation4 + $0x48] sm:$0xff] %vm1258, %v931
        %1574 = vst.msk [vmem:[#allocation4 + $0x50] sm:$0xff] %vm1258, %v932
        %1575 = vst.msk [vmem:[#allocation4 + $0x58] sm:$0xff] %vm1258, %v933
        %1576 = vst.msk [vmem:[#allocation4 + $0x60] sm:$0xff] %vm1258, %v934
        %1577 = vst.msk [vmem:[#allocation4 + $0x68] sm:$0xff] %vm1258, %v935
        %1578 = vst.msk [vmem:[#allocation4 + $0x70] sm:$0xff] %vm1258, %v936
        %1579 = vst.msk [vmem:[#allocation4 + $0x78] sm:$0xff] %vm1258, %v937
        %p1580 = scmp.eq.s32.totalorder %s33, 1
        // Predicated region
        $region45: #{tpu_custom_call.1} parent=35 // pred_check
          %p1581 = pneg %p1580
        $region46: #{tpu_custom_call.1} parent=35 // pred_check_branch
          %1583 = sbr.rel (%p1581) target = $region48
        $region47: #{tpu_custom_call.1} parent=35 // pred_region
          %v1584 = vld [vmem:[#allocation3] sm:$0xff]
          %v1585 = vld [vmem:[#allocation3 + $0x8] sm:$0xff]
          %v1586 = vld [vmem:[#allocation3 + $0x10] sm:$0xff]
          %v1587 = vld [vmem:[#allocation3 + $0x18] sm:$0xff]
          %v1588 = vld [vmem:[#allocation3 + $0x20] sm:$0xff]
          %v1589 = vld [vmem:[#allocation3 + $0x28] sm:$0xff]
          %v1590 = vld [vmem:[#allocation3 + $0x30] sm:$0xff]
          %v1591 = vld [vmem:[#allocation3 + $0x38] sm:$0xff]
          %v1592 = vld [vmem:[#allocation3 + $0x40] sm:$0xff]
          %v1593 = vld [vmem:[#allocation3 + $0x48] sm:$0xff]
          %v1594 = vld [vmem:[#allocation3 + $0x50] sm:$0xff]
          %v1595 = vld [vmem:[#allocation3 + $0x58] sm:$0xff]
          %v1596 = vld [vmem:[#allocation3 + $0x60] sm:$0xff]
          %v1597 = vld [vmem:[#allocation3 + $0x68] sm:$0xff]
          %v1598 = vld [vmem:[#allocation3 + $0x70] sm:$0xff]
          %v1599 = vld [vmem:[#allocation3 + $0x78] sm:$0xff]
          %v1600 = vmax.f32 %v1584, 1e-30
          %v1601 = vmax.f32 %v1585, 1e-30
          %v1602 = vmax.f32 %v1586, 1e-30
          %v1603 = vmax.f32 %v1587, 1e-30
          %v1604 = vmax.f32 %v1588, 1e-30
          %v1605 = vmax.f32 %v1589, 1e-30
          %v1606 = vmax.f32 %v1590, 1e-30
          %v1607 = vmax.f32 %v1591, 1e-30
          %v1608 = vmax.f32 %v1592, 1e-30
          %v1609 = vmax.f32 %v1593, 1e-30
          %v1610 = vmax.f32 %v1594, 1e-30
          %v1611 = vmax.f32 %v1595, 1e-30
          %v1612 = vmax.f32 %v1596, 1e-30
          %v1613 = vmax.f32 %v1597, 1e-30
          %v1614 = vmax.f32 %v1598, 1e-30
          %v1615 = vmax.f32 %v1599, 1e-30
          %v1616 = vrcp.pop %v1600
          %v1617 = vmul.f32 1.0, %v1616
          %v1618 = vrcp.pop %v1601
          %v1619 = vmul.f32 1.0, %v1618
          %v1620 = vrcp.pop %v1602
          %v1621 = vmul.f32 1.0, %v1620
          %v1622 = vrcp.pop %v1603
          %v1623 = vmul.f32 1.0, %v1622
          %v1624 = vrcp.pop %v1604
          %v1625 = vmul.f32 1.0, %v1624
          %v1626 = vrcp.pop %v1605
          %v1627 = vmul.f32 1.0, %v1626
          %v1628 = vrcp.pop %v1606
          %v1629 = vmul.f32 1.0, %v1628
          %v1630 = vrcp.pop %v1607
          %v1631 = vmul.f32 1.0, %v1630
          %v1632 = vrcp.pop %v1608
          %v1633 = vmul.f32 1.0, %v1632
          %v1634 = vrcp.pop %v1609
          %v1635 = vmul.f32 1.0, %v1634
          %v1636 = vrcp.pop %v1610
          %v1637 = vmul.f32 1.0, %v1636
          %v1638 = vrcp.pop %v1611
          %v1639 = vmul.f32 1.0, %v1638
          %v1640 = vrcp.pop %v1612
          %v1641 = vmul.f32 1.0, %v1640
          %v1642 = vrcp.pop %v1613
          %v1643 = vmul.f32 1.0, %v1642
          %v1644 = vrcp.pop %v1614
          %v1645 = vmul.f32 1.0, %v1644
          %v1646 = vrcp.pop %v1615
          %v1647 = vmul.f32 1.0, %v1646
          %v1648 = vld [vmem:[#allocation2] sm:$0xff]
          %v1649 = vld [vmem:[#allocation2 + $0x8] sm:$0xff]
          %v1650 = vld [vmem:[#allocation2 + $0x10] sm:$0xff]
          %v1651 = vld [vmem:[#allocation2 + $0x18] sm:$0xff]
          %v1652 = vld [vmem:[#allocation2 + $0x20] sm:$0xff]
          %v1653 = vld [vmem:[#allocation2 + $0x28] sm:$0xff]
          %v1654 = vld [vmem:[#allocation2 + $0x30] sm:$0xff]
          %v1655 = vld [vmem:[#allocation2 + $0x38] sm:$0xff]
          %v1656 = vld [vmem:[#allocation2 + $0x40] sm:$0xff]
          %v1657 = vld [vmem:[#allocation2 + $0x48] sm:$0xff]
          %v1658 = vld [vmem:[#allocation2 + $0x50] sm:$0xff]
          %v1659 = vld [vmem:[#allocation2 + $0x58] sm:$0xff]
          %v1660 = vld [vmem:[#allocation2 + $0x60] sm:$0xff]
          %v1661 = vld [vmem:[#allocation2 + $0x68] sm:$0xff]
          %v1662 = vld [vmem:[#allocation2 + $0x70] sm:$0xff]
          %v1663 = vld [vmem:[#allocation2 + $0x78] sm:$0xff]
          %1665 = vset.pattern.permute.xlu0 0
          %1666 = vperm.xlu0 %1665, %v1617
          %v1667 = vpop.permute.xlu0 %1666
          %1670 = vset.pattern.permute.xlu0 0
          %1671 = vperm.xlu0 %1670, %v1619
          %v1672 = vpop.permute.xlu0 %1671
          %1675 = vset.pattern.permute.xlu0 0
          %1676 = vperm.xlu0 %1675, %v1621
          %v1677 = vpop.permute.xlu0 %1676
          %1680 = vset.pattern.permute.xlu0 0
          %1681 = vperm.xlu0 %1680, %v1623
          %v1682 = vpop.permute.xlu0 %1681
          %1685 = vset.pattern.permute.xlu0 0
          %1686 = vperm.xlu0 %1685, %v1625
          %v1687 = vpop.permute.xlu0 %1686
          %1690 = vset.pattern.permute.xlu0 0
          %1691 = vperm.xlu0 %1690, %v1627
          %v1692 = vpop.permute.xlu0 %1691
          %1695 = vset.pattern.permute.xlu0 0
          %1696 = vperm.xlu0 %1695, %v1629
          %v1697 = vpop.permute.xlu0 %1696
          %1700 = vset.pattern.permute.xlu0 0
          %1701 = vperm.xlu0 %1700, %v1631
          %v1702 = vpop.permute.xlu0 %1701
          %1705 = vset.pattern.permute.xlu0 0
          %1706 = vperm.xlu0 %1705, %v1633
          %v1707 = vpop.permute.xlu0 %1706
          %1710 = vset.pattern.permute.xlu0 0
          %1711 = vperm.xlu0 %1710, %v1635
          %v1712 = vpop.permute.xlu0 %1711
          %1715 = vset.pattern.permute.xlu0 0
          %1716 = vperm.xlu0 %1715, %v1637
          %v1717 = vpop.permute.xlu0 %1716
          %1720 = vset.pattern.permute.xlu0 0
          %1721 = vperm.xlu0 %1720, %v1639
          %v1722 = vpop.permute.xlu0 %1721
          %1725 = vset.pattern.permute.xlu0 0
          %1726 = vperm.xlu0 %1725, %v1641
          %v1727 = vpop.permute.xlu0 %1726
          %1730 = vset.pattern.permute.xlu0 0
          %1731 = vperm.xlu0 %1730, %v1643
          %v1732 = vpop.permute.xlu0 %1731
          %1735 = vset.pattern.permute.xlu0 0
          %1736 = vperm.xlu0 %1735, %v1645
          %v1737 = vpop.permute.xlu0 %1736
          %1740 = vset.pattern.permute.xlu0 0
          %1741 = vperm.xlu0 %1740, %v1647
          %v1742 = vpop.permute.xlu0 %1741
          %v1744 = vmul.f32 %v1648, %v1667
          %v1745 = vmul.f32 %v1649, %v1672
          %v1746 = vmul.f32 %v1650, %v1677
          %v1747 = vmul.f32 %v1651, %v1682
          %v1748 = vmul.f32 %v1652, %v1687
          %v1749 = vmul.f32 %v1653, %v1692
          %v1750 = vmul.f32 %v1654, %v1697
          %v1751 = vmul.f32 %v1655, %v1702
          %v1752 = vmul.f32 %v1656, %v1707
          %v1753 = vmul.f32 %v1657, %v1712
          %v1754 = vmul.f32 %v1658, %v1717
          %v1755 = vmul.f32 %v1659, %v1722
          %v1756 = vmul.f32 %v1660, %v1727
          %v1757 = vmul.f32 %v1661, %v1732
          %v1758 = vmul.f32 %v1662, %v1737
          %v1759 = vmul.f32 %v1663, %v1742
          %1760 = vst [vmem:[%s306] sm:$0xff] %v1744
          %1761 = vst [vmem:[%s306 + $0x8] sm:$0xff] %v1745
          %1762 = vst [vmem:[%s306 + $0x10] sm:$0xff] %v1746
          %1763 = vst [vmem:[%s306 + $0x18] sm:$0xff] %v1747
          %1764 = vst [vmem:[%s306 + $0x20] sm:$0xff] %v1748
          %1765 = vst [vmem:[%s306 + $0x28] sm:$0xff] %v1749
          %1766 = vst [vmem:[%s306 + $0x30] sm:$0xff] %v1750
          %1767 = vst [vmem:[%s306 + $0x38] sm:$0xff] %v1751
          %1768 = vst [vmem:[%s306 + $0x40] sm:$0xff] %v1752
          %1769 = vst [vmem:[%s306 + $0x48] sm:$0xff] %v1753
          %1770 = vst [vmem:[%s306 + $0x50] sm:$0xff] %v1754
          %1771 = vst [vmem:[%s306 + $0x58] sm:$0xff] %v1755
          %1772 = vst [vmem:[%s306 + $0x60] sm:$0xff] %v1756
          %1773 = vst [vmem:[%s306 + $0x68] sm:$0xff] %v1757
          %1774 = vst [vmem:[%s306 + $0x70] sm:$0xff] %v1758
          %1775 = vst [vmem:[%s306 + $0x78] sm:$0xff] %v1759
        $region48: #{tpu_custom_call.1} parent=35 // pred_fallthru
          _
        %s1776 = sand.u32 %s154, 1
        %s1777 = scalar_lea.sflag [#allocation9], %s1776
        %s1778 = sand.u32 %s154, 1
        %s1779 = smul.addr %s1778, 128
        %s1780 = scalar_lea.vmem [#allocation10], %s1779
        // Predicated region
        $region49: #{tpu_custom_call.1} parent=35 // pred_check
          %p1781 = pneg %p164
        $region50: #{tpu_custom_call.1} parent=35 // pred_check_branch
          %1783 = sbr.rel (%p1781) target = $region52
        $region51: #{tpu_custom_call.1} parent=35 // pred_region
          %s1784 = smul.u32 16, %s32
          %s1786 = ssub.s32 2048, 2048
          %1787 = vsyncadd %s1777, %s1786
          %s1788 = smul.addr %s1784, 128
          %s1789 = scalar_lea.hbm %s5, %s1788
          %s1790 = sshll.u32 %s1780, 4
          %s1791 = int_to_ptr.vmem [resolvable:$true] %s1790
          %1796 = dma.vmem_to_hbm [thread:$0]  %s1791, 2048, %s1789, %s1777, 128, 128, 8
        $region52: #{tpu_custom_call.1} parent=35 // pred_fallthru
          _
      $region36: #{tpu_custom_call.1} parent=5 // pred_fallthru
        _
      %p1797 = scmp.le.s32.totalorder 2, %s23
      // Predicated region
      $region53: #{tpu_custom_call.1} parent=5 // pred_check
        %p1798 = pneg %p1797
      $region54: #{tpu_custom_call.1} parent=5 // pred_check_branch
        %1800 = sbr.rel (%p1798) target = $region56
      $region55: #{tpu_custom_call.1} parent=5 // pred_region
        %s1801 = ssub.s32 %s23, 2
        // Predicated region
        $region57: #{tpu_custom_call.1} parent=55 // pred_check
          %p1802 = pneg %p170
        $region58: #{tpu_custom_call.1} parent=55 // pred_check_branch
          %1804 = sbr.rel (%p1802) target = $region60
        $region59: #{tpu_custom_call.1} parent=55 // pred_region
          %s1805 = sand.u32 %s155, 1
          %s1806 = scalar_lea.sflag [#allocation9], %s1805
          %s1807 = sand.u32 %s155, 1
          %s1808 = smul.addr %s1807, 128
          %s1809 = scalar_lea.vmem [#allocation10], %s1808
          %1810 = dma.done %s1806, 2048
        $region60: #{tpu_custom_call.1} parent=55 // pred_fallthru
          _
      $region56: #{tpu_custom_call.1} parent=5 // pred_fallthru
        _
    $region6: #{tpu_custom_call.1} parent=1 // loop_footer
      %s27 = sadd.s32 1, %s23
    $region7: #{tpu_custom_call.1} parent=1 // loop_footer_branch
      %22 = sbr.rel target = $region3
    $region8: #{tpu_custom_call.1} parent=1 // loop_exit
      _
    %1811 = vsyncpa [#allocation8], 1
    %s1812 = scalar_lea.sflag [#allocation8], 1
    %1813 = vsyncpa %s1812, 1
    %1814 = vsyncpa [#allocation9], 1
    %s1815 = scalar_lea.sflag [#allocation9], 1
    %1816 = vsyncpa %s1815, 1

</llo_original>
